<compile_context>
chip_gen: v7x
topology: tpu7x:2x2x1
jax: 0.10.0
libtpu: 0.0.40
codegen_flags: <defaults>
</compile_context>

<pallas_src>
import functools
import math

import numpy as np
import jax
import jax.numpy as jnp
from jax.experimental import pallas as pl
from jax.experimental.pallas import tpu as pltpu

EMBED_DIM = 32            # args.fine_embed_dim
NHEAD = 4                 # args.fine_num_decoder_heads
HEAD_DIM = EMBED_DIM // NHEAD
FF_DIM = EMBED_DIM * 4    # dim_feedforward = 128
HALF_DIM = EMBED_DIM // 2
NUM_OBJECTS = 8
NUM_HINTS = 6
BATCH = 2
LN_EPS = 1e-5
NEG_INF = -1e30
OUT_PAD = 128             # lane-dense output width (cols [0:2] are the real offsets)
MAX_ITEMS_PER_STEP = 8    # batch items fused per grid step (8-16 for production batches)

# weight-slab lane offsets (every stored block has EMBED_DIM rows)
_W_SA = 0                                  # [Wq*scale | Wk | WvO]  width 192
_W_CAQ = _W_SA + 6 * EMBED_DIM             # 192, width 32 (Wq*scale)
_W_CAKVO = _W_CAQ + EMBED_DIM              # 224, width 160 ([Wk | WvO])
_W_FF1 = _W_CAKVO + 5 * EMBED_DIM          # 384, width 128
_W_FF2T = _W_FF1 + FF_DIM                  # 512, width 128 (ff_w2 transposed)
_W_MLP1 = _W_FF2T + FF_DIM                 # 640, width 32 (padded from 16)
_W_MLP2 = _W_MLP1 + EMBED_DIM              # 672, width 128 (padded from 2)
_W_TOTAL = _W_MLP2 + OUT_PAD               # 800

# bias / LN slab row indices (f32, lane width 192)
(_B_SA, _B_SAO, _B_CAQ, _B_CAKVO, _B_CAO,
 _LN1G, _LN1B, _LN2G, _LN2B, _LN3G, _LN3B,
 _B_FF1, _B_FF2, _B_MLP1, _B_MLP2) = range(15)
_B_ROWS = 16
_B_LANES = 6 * EMBED_DIM   # 192


# ---------------------------------------------------------------------------
# Shared math helpers (pure jnp -> usable inside the kernel and in the reference).
# ---------------------------------------------------------------------------
def _layer_norm(x, gamma, beta):
    mean = jnp.mean(x, axis=-1, keepdims=True)
    var = jnp.mean((x - mean) ** 2, axis=-1, keepdims=True)
    return (x - mean) * jax.lax.rsqrt(var + LN_EPS) * gamma + beta


def _mha(q_in, kv_in, wq, bq, wk, bk, wv, bv, wo, bo):
    """Reference multi-head attention; linear weights are (in, out) = W.T of nn.Linear."""
    q = jnp.dot(q_in, wq) + bq
    k = jnp.dot(kv_in, wk) + bk
    v = jnp.dot(kv_in, wv) + bv
    scale = 1.0 / math.sqrt(HEAD_DIM)
    head_outs = []
    for h in range(NHEAD):
        sl = slice(h * HEAD_DIM, (h + 1) * HEAD_DIM)
        qh, kh, vh = q[:, sl], k[:, sl], v[:, sl]
        s = jax.lax.dot_general(qh, kh, (((1,), (1,)), ((), ()))) * scale
        a = jax.nn.softmax(s, axis=-1)
        head_outs.append(jnp.dot(a, vh))
    o = jnp.concatenate(head_outs, axis=-1)
    return jnp.dot(o, wo) + bo


# ---------------------------------------------------------------------------
# Pallas kernel: one grid step processes GROUP batch items stacked along sublanes.
# ---------------------------------------------------------------------------
def cross_match_kernel(group, hint_ref, obj_ref, mask_ref, w_ref, b_ref, out_ref):
    f32, bf16 = jnp.float32, jnp.bfloat16
    D = EMBED_DIM
    gh = group * NUM_HINTS
    go = group * NUM_OBJECTS

    W = w_ref[...]                     # (32, 800) bf16 -- resident across grid steps
    B = b_ref[...]                     # (16, 192) f32
    masks = mask_ref[...]              # (NHEAD*gh, D + gh + go) f32, precomputed constants
    head_mask = masks[:, :D]                                   # head selection for Q_blk
    sa_mask = masks[:, D:D + gh]                               # additive per-item mask
    ca_mask = masks[:, D + gh:D + gh + go]

    def mm(a, b):                      # bf16 MXU operands, f32 accumulate
        return jnp.dot(a.astype(bf16), b.astype(bf16), preferred_element_type=f32)

    def mm_tb(a, b):                   # a @ b.T
        return jax.lax.dot_general(a.astype(bf16), b.astype(bf16),
                                   (((1,), (1,)), ((), ())),
                                   preferred_element_type=f32)

    def attention(q, k, vo, bias_mask, bo):
        """q:(gh,D) already scaled (1/sqrt(Hd) folded into Wq); k:(Skv,D); vo:(Skv,NHEAD*D).

        Queries are block-stacked along sublanes per head so the scores and the (already
        Wo-projected) A@Vo contraction are one matmul each; the per-head results are the
        diagonal (sublane-block, lane-block) tiles of avo.
        """
        q_blk = jnp.concatenate([q] * NHEAD, axis=0) * head_mask    # (NHEAD*gh, D)
        s = mm_tb(q_blk, k) + bias_mask                             # (NHEAD*gh, Skv)
        m = jnp.max(s, axis=-1, keepdims=True)
        e = jnp.exp(s - m)
        p = e / jnp.sum(e, axis=-1, keepdims=True)                  # exact reciprocal (review)
        avo = mm(p, vo)                                             # (NHEAD*gh, NHEAD*D)
        out = bo
        for h in range(NHEAD):
            out = out + avo[h * gh:(h + 1) * gh, h * D:(h + 1) * D]
        return out                                                  # (gh, D)

    # --- object encodings -> F.normalize(dim=-1) -> memory (desc0, batch-stacked) ---
    obj = obj_ref[0]                                                # (go, D)
    ssq = jnp.sum(obj * obj, axis=-1, keepdims=True)
    memory = obj * jax.lax.rsqrt(jnp.maximum(ssq, 1e-24))

    x = hint_ref[0]                                                 # desc1 (gh, D)

    # --- self-attention (fused Q|K|VO projection) ---
    proj = mm(x, W[:, _W_SA:_W_SA + 6 * D]) + B[_B_SA:_B_SA + 1, :6 * D]
    sa = attention(proj[:, :D], proj[:, D:2 * D], proj[:, 2 * D:6 * D],
                   sa_mask, B[_B_SAO:_B_SAO + 1, :D])
    x = _layer_norm(x + sa, B[_LN1G:_LN1G + 1, :D], B[_LN1B:_LN1B + 1, :D])

    # --- cross-attention over the normalized object memory (fused K|VO projection) ---
    q_ca = mm(x, W[:, _W_CAQ:_W_CAQ + D]) + B[_B_CAQ:_B_CAQ + 1, :D]
    kvo = mm(memory, W[:, _W_CAKVO:_W_CAKVO + 5 * D]) + B[_B_CAKVO:_B_CAKVO + 1, :5 * D]
    ca = attention(q_ca, kvo[:, :D], kvo[:, D:5 * D],
                   ca_mask, B[_B_CAO:_B_CAO + 1, :D])
    x = _layer_norm(x + ca, B[_LN2G:_LN2G + 1, :D], B[_LN2B:_LN2B + 1, :D])

    # --- feed-forward (ff_w2 stored transposed -> trans-B matmul) ---
    h1 = jnp.maximum(mm(x, W[:, _W_FF1:_W_FF1 + FF_DIM])
                     + B[_B_FF1:_B_FF1 + 1, :FF_DIM], 0.0)
    ff = mm_tb(h1, W[:, _W_FF2T:_W_FF2T + FF_DIM]) + B[_B_FF2:_B_FF2 + 1, :D]
    x = _layer_norm(x + ff, B[_LN3G:_LN3G + 1, :D], B[_LN3B:_LN3B + 1, :D])

    # --- per-item max pool + mlp_offsets head (Linear-ReLU-Linear) ---
    pooled = jnp.concatenate(
        [jnp.max(x[g * NUM_HINTS:(g + 1) * NUM_HINTS, :], axis=0, keepdims=True)
         for g in range(group)], axis=0)                            # (group, D)
    m1 = jnp.maximum(mm(pooled, W[:, _W_MLP1:_W_MLP1 + D])
                     + B[_B_MLP1:_B_MLP1 + 1, :D], 0.0)             # (group, D)
    out = mm(m1, W[:, _W_MLP2:_W_MLP2 + OUT_PAD]) + B[_B_MLP2:_B_MLP2 + 1, :OUT_PAD]
    out_ref[0] = out                                                # (group, 128) lane-dense


# ---------------------------------------------------------------------------
# Host-side constant / parameter packing (runs ONCE in make_cross_match_fn).
# ---------------------------------------------------------------------------
def _fold_value_output(wv, wo):
    """Fold the per-head output projection into the value projection:
    WvO[:, h*D:(h+1)*D] = Wv[:, h*Hd:(h+1)*Hd] @ Wo[h*Hd:(h+1)*Hd, :]. Works for bias too."""
    blocks = [wv[:, h * HEAD_DIM:(h + 1) * HEAD_DIM]
              @ wo[h * HEAD_DIM:(h + 1) * HEAD_DIM, :] for h in range(NHEAD)]
    return jnp.concatenate(blocks, axis=1)


def pack_params(p):
    """Pack 30 parameter arrays into one bf16 weight slab + one f32 bias/LN slab."""
    scale = 1.0 / math.sqrt(HEAD_DIM)
    w_sa = jnp.concatenate([p["sa_wq"] * scale, p["sa_wk"],
                            _fold_value_output(p["sa_wv"], p["sa_wo"])], axis=1)
    b_sa = jnp.concatenate([p["sa_bq"] * scale, p["sa_bk"],
                            _fold_value_output(p["sa_bv"], p["sa_wo"])], axis=1)
    w_cakvo = jnp.concatenate([p["ca_wk"],
                               _fold_value_output(p["ca_wv"], p["ca_wo"])], axis=1)
    b_cakvo = jnp.concatenate([p["ca_bk"],
                               _fold_value_output(p["ca_bv"], p["ca_wo"])], axis=1)
    w_mlp1 = jnp.pad(p["mlp_w1"], ((0, 0), (0, EMBED_DIM - HALF_DIM)))
    b_mlp1 = jnp.pad(p["mlp_b1"], ((0, 0), (0, EMBED_DIM - HALF_DIM)))
    w_mlp2 = jnp.pad(p["mlp_w2"], ((0, EMBED_DIM - HALF_DIM), (0, OUT_PAD - 2)))
    b_mlp2 = jnp.pad(p["mlp_b2"], ((0, 0), (0, OUT_PAD - 2)))

    w_slab = jnp.concatenate(
        [w_sa, p["ca_wq"] * scale, w_cakvo, p["ff_w1"], p["ff_w2"].T, w_mlp1, w_mlp2],
        axis=1).astype(jnp.bfloat16)
    assert w_slab.shape == (EMBED_DIM, _W_TOTAL), w_slab.shape

    def row(v):
        v = jnp.asarray(v, jnp.float32).reshape(1, -1)
        return jnp.pad(v, ((0, 0), (0, _B_LANES - v.shape[1])))

    rows = [row(b_sa), row(p["sa_bo"]), row(p["ca_bq"] * scale), row(b_cakvo),
            row(p["ca_bo"]),
            row(p["ln1_g"]), row(p["ln1_b"]), row(p["ln2_g"]), row(p["ln2_b"]),
            row(p["ln3_g"]), row(p["ln3_b"]),
            row(p["ff_b1"]), row(p["ff_b2"]), row(b_mlp1), row(b_mlp2)]
    b_slab = jnp.concatenate(
        rows + [jnp.zeros((_B_ROWS - len(rows), _B_LANES), jnp.float32)], axis=0)
    return w_slab, b_slab


def build_masks(group):
    """Compile-time constants: head-selection mask for the block-stacked queries plus the
    per-item (block-diagonal batch) additive attention masks, tiled per head along sublanes."""
    gh, go = group * NUM_HINTS, group * NUM_OBJECTS
    hr = NHEAD * gh
    head = np.zeros((hr, EMBED_DIM), np.float32)
    for h in range(NHEAD):
        head[h * gh:(h + 1) * gh, h * HEAD_DIM:(h + 1) * HEAD_DIM] = 1.0
    hint_item = np.arange(gh) // NUM_HINTS
    obj_item = np.arange(go) // NUM_OBJECTS
    sa = np.where(hint_item[:, None] == hint_item[None, :], 0.0, NEG_INF).astype(np.float32)
    ca = np.where(hint_item[:, None] == obj_item[None, :], 0.0, NEG_INF).astype(np.float32)
    sa = np.tile(sa, (NHEAD, 1))
    ca = np.tile(ca, (NHEAD, 1))
    return jnp.asarray(np.concatenate([head, sa, ca], axis=1))


def make_cross_match_fn(params, batch_size):
    """Pack parameters/constants ONCE and return a jitted forward closure (review item 1)."""
    w_slab, b_slab = pack_params(params)
    group = max(1, min(MAX_ITEMS_PER_STEP, batch_size))
    num_groups = pl.cdiv(batch_size, group)
    padded_batch = num_groups * group
    gh, go = group * NUM_HINTS, group * NUM_OBJECTS
    masks = build_masks(group)

    # Advisory cost for XLA scheduling around the custom call.
    mmf = lambda m, k, n: 2 * m * k * n
    hr = NHEAD * gh
    step_flops = (mmf(gh, EMBED_DIM, 6 * EMBED_DIM) + mmf(gh, EMBED_DIM, EMBED_DIM)
                  + mmf(go, EMBED_DIM, 5 * EMBED_DIM)
                  + mmf(hr, EMBED_DIM, gh) + mmf(hr, gh, NHEAD * EMBED_DIM)
                  + mmf(hr, EMBED_DIM, go) + mmf(hr, go, NHEAD * EMBED_DIM)
                  + mmf(gh, EMBED_DIM, FF_DIM) + mmf(gh, FF_DIM, EMBED_DIM)
                  + mmf(group, EMBED_DIM, EMBED_DIM) + mmf(group, EMBED_DIM, OUT_PAD)
                  + 24 * gh * EMBED_DIM)
    step_trans = hr * (gh + go) + go + 3 * gh
    bytes_accessed = (4 * (num_groups * (gh + go) * EMBED_DIM + masks.size + b_slab.size
                           + num_groups * group * OUT_PAD) + 2 * w_slab.size)

    kern = pl.pallas_call(
        functools.partial(cross_match_kernel, group),
        out_shape=jax.ShapeDtypeStruct((num_groups, group, OUT_PAD), jnp.float32),
        grid=(num_groups,),
        in_specs=[
            pl.BlockSpec((1, gh, EMBED_DIM), lambda g: (g, 0, 0)),   # hints (per step)
            pl.BlockSpec((1, go, EMBED_DIM), lambda g: (g, 0, 0)),   # objects (per step)
            pl.BlockSpec(masks.shape, lambda g: (0, 0)),             # resident constants
            pl.BlockSpec(w_slab.shape, lambda g: (0, 0)),            # resident bf16 weights
            pl.BlockSpec(b_slab.shape, lambda g: (0, 0)),            # resident f32 biases/LN
        ],
        out_specs=pl.BlockSpec((1, group, OUT_PAD), lambda g: (g, 0, 0)),
        compiler_params=pltpu.CompilerParams(dimension_semantics=("parallel",)),
        cost_estimate=pl.CostEstimate(flops=int(num_groups * step_flops),
                                      transcendentals=int(num_groups * step_trans),
                                      bytes_accessed=int(bytes_accessed)),
    )

    @jax.jit
    def forward(object_feats, hint_feats):
        pad = padded_batch - batch_size
        obj = jnp.pad(object_feats, ((0, pad), (0, 0), (0, 0)))
        hint = jnp.pad(hint_feats, ((0, pad), (0, 0), (0, 0)))
        out = kern(hint.reshape(num_groups, gh, EMBED_DIM),
                   obj.reshape(num_groups, go, EMBED_DIM),
                   masks, w_slab, b_slab)
        return out.reshape(padded_batch, OUT_PAD)[:batch_size, :2]

    return forward


# ---------------------------------------------------------------------------
# Deterministic parameter init (PyTorch Linear-style uniform; LN gamma=1, beta=0).
# Linear weights are stored directly in (in, out) layout == W.T of nn.Linear.
# ---------------------------------------------------------------------------
def init_params(key):
    D, Fd, H = EMBED_DIM, FF_DIM, HALF_DIM

    def linear(k, din, dout):
        kw, kb = jax.random.split(k)
        bound = 1.0 / math.sqrt(din)
        w = jax.random.uniform(kw, (din, dout), jnp.float32, -bound, bound)
        b = jax.random.uniform(kb, (1, dout), jnp.float32, -bound, bound)
        return w, b

    keys = jax.random.split(key, 12)
    p = {}
    p["sa_wq"], p["sa_bq"] = linear(keys[0], D, D)
    p["sa_wk"], p["sa_bk"] = linear(keys[1], D, D)
    p["sa_wv"], p["sa_bv"] = linear(keys[2], D, D)
    p["sa_wo"], p["sa_bo"] = linear(keys[3], D, D)
    p["ca_wq"], p["ca_bq"] = linear(keys[4], D, D)
    p["ca_wk"], p["ca_bk"] = linear(keys[5], D, D)
    p["ca_wv"], p["ca_bv"] = linear(keys[6], D, D)
    p["ca_wo"], p["ca_bo"] = linear(keys[7], D, D)
    for name in ("ln1", "ln2", "ln3"):
        p[name + "_g"] = jnp.ones((1, D), jnp.float32)
        p[name + "_b"] = jnp.zeros((1, D), jnp.float32)
    p["ff_w1"], p["ff_b1"] = linear(keys[8], D, Fd)
    p["ff_w2"], p["ff_b2"] = linear(keys[9], Fd, D)
    p["mlp_w1"], p["mlp_b1"] = linear(keys[10], D, H)
    p["mlp_w2"], p["mlp_b2"] = linear(keys[11], H, 2)
    return p


# Pure-JAX reference (same semantics as the PyTorch module, no Pallas).
def cross_match_reference(object_feats, hint_feats, p):
    outs = []
    for b in range(object_feats.shape[0]):
        obj = object_feats[b]
        nrm = jnp.sqrt(jnp.sum(obj * obj, axis=-1, keepdims=True))
        memory = obj / jnp.maximum(nrm, 1e-12)
        x = hint_feats[b]
        sa = _mha(x, x, p["sa_wq"], p["sa_bq"], p["sa_wk"], p["sa_bk"],
                  p["sa_wv"], p["sa_bv"], p["sa_wo"], p["sa_bo"])
        x = _layer_norm(x + sa, p["ln1_g"], p["ln1_b"])
        ca = _mha(x, memory, p["ca_wq"], p["ca_bq"], p["ca_wk"], p["ca_bk"],
                  p["ca_wv"], p["ca_bv"], p["ca_wo"], p["ca_bo"])
        x = _layer_norm(x + ca, p["ln2_g"], p["ln2_b"])
        h = jnp.maximum(x @ p["ff_w1"] + p["ff_b1"], 0.0)
        x = _layer_norm(x + h @ p["ff_w2"] + p["ff_b2"], p["ln3_g"], p["ln3_b"])
        pooled = jnp.max(x, axis=0, keepdims=True)
        m = jnp.maximum(pooled @ p["mlp_w1"] + p["mlp_b1"], 0.0)
        outs.append((m @ p["mlp_w2"] + p["mlp_b2"])[0])
    return jnp.stack(outs)


if __name__ == "__main__":
    key = jax.random.PRNGKey(0)
    k_obj, k_hint, k_param = jax.random.split(key, 3)

    # Synthetic encoder outputs (see TODO(synk) above).
    object_feats = jax.random.normal(
        k_obj, (BATCH, NUM_OBJECTS, EMBED_DIM), dtype=jnp.float32)
    hint_feats = jax.random.normal(
        k_hint, (BATCH, NUM_HINTS, EMBED_DIM), dtype=jnp.float32)
    params = init_params(k_param)

    forward = make_cross_match_fn(params, BATCH)   # params packed once, outside the call path
    offsets = forward(object_feats, hint_feats)
    jax.block_until_ready(offsets)

    ref = cross_match_reference(object_feats, hint_feats, params)
    assert offsets.shape == (BATCH, 2), offsets.shape
    # Softmax uses the exact reciprocal now; the remaining (small) mismatch vs the f32
    # reference comes from bf16 matmul operands with f32 accumulation.
    assert jnp.allclose(offsets, ref, atol=2e-2, rtol=2e-2), (offsets, ref)

    print("KERNEL_OK")
</pallas_src>

<mosaic_0001>
module attributes {stable_mosaic.version = 11 : i64} {
  func.func @cross_match_kernel(%arg0: i32, %arg1: memref<1x12x32xf32, #tpu.memory_space<vmem>>, %arg2: memref<1x16x32xf32, #tpu.memory_space<vmem>>, %arg3: memref<48x60xf32, #tpu.memory_space<vmem>>, %arg4: memref<32x800xbf16, #tpu.memory_space<vmem>>, %arg5: memref<16x192xf32, #tpu.memory_space<vmem>>, %arg6: memref<1x2x128xf32, #tpu.memory_space<vmem>>) attributes {dimension_semantics = [#tpu.dimension_semantics<parallel>], iteration_bounds = array<i64: 1>, scalar_prefetch = 0 : i64, scratch_operands = 0 : i64, tpu.core_type = #tpu.core_type<tc>, window_params = [{transform_indices = @transform_0, window_bounds = array<i64: 1, 12, 32>}, {transform_indices = @transform_1, window_bounds = array<i64: 1, 16, 32>}, {pipeline_mode = #tpu.pipeline_mode<synchronous>, transform_indices = @transform_2, window_bounds = array<i64: 48, 60>}, {pipeline_mode = #tpu.pipeline_mode<synchronous>, transform_indices = @transform_3, window_bounds = array<i64: 32, 800>}, {pipeline_mode = #tpu.pipeline_mode<synchronous>, transform_indices = @transform_4, window_bounds = array<i64: 16, 192>}, {transform_indices = @transform_5, window_bounds = array<i64: 1, 2, 128>}]} {
    %c0 = arith.constant 0 : index
    %c0_0 = arith.constant 0 : index
    %0 = vector.load %arg4[%c0, %c0_0] : memref<32x800xbf16, #tpu.memory_space<vmem>>, vector<32x800xbf16>
    %c0_1 = arith.constant 0 : index
    %c0_2 = arith.constant 0 : index
    %1 = vector.load %arg5[%c0_1, %c0_2] : memref<16x192xf32, #tpu.memory_space<vmem>>, vector<16x192xf32>
    %c0_3 = arith.constant 0 : index
    %c0_4 = arith.constant 0 : index
    %2 = vector.load %arg3[%c0_3, %c0_4] : memref<48x60xf32, #tpu.memory_space<vmem>>, vector<48x60xf32>
    %3 = vector.extract_strided_slice %2 {offsets = [0, 0], sizes = [48, 32], strides = [1, 1]} : vector<48x60xf32> to vector<48x32xf32>
    %4 = vector.extract_strided_slice %2 {offsets = [0, 32], sizes = [48, 12], strides = [1, 1]} : vector<48x60xf32> to vector<48x12xf32>
    %5 = vector.extract_strided_slice %2 {offsets = [0, 44], sizes = [48, 16], strides = [1, 1]} : vector<48x60xf32> to vector<48x16xf32>
    %c0_5 = arith.constant 0 : index
    %c0_6 = arith.constant 0 : index
    %c0_7 = arith.constant 0 : index
    %6 = vector.load %arg2[%c0_5, %c0_6, %c0_7] : memref<1x16x32xf32, #tpu.memory_space<vmem>>, vector<1x16x32xf32>
    %7 = vector.shape_cast %6 : vector<1x16x32xf32> to vector<16x32xf32>
    %8 = arith.mulf %7, %7 : vector<16x32xf32>
    %cst = arith.constant dense<0.000000e+00> : vector<16xf32>
    %9 = vector.multi_reduction <add>, %8, %cst [1] : vector<16x32xf32> to vector<16xf32>
    %10 = vector.shape_cast %9 : vector<16xf32> to vector<16x1xf32>
    %cst_8 = arith.constant 1.000000e-24 : f32
    %11 = vector.broadcast %cst_8 : f32 to vector<16x1xf32>
    %12 = arith.maximumf %10, %11 : vector<16x1xf32>
    %13 = math.rsqrt %12 : vector<16x1xf32>
    %14 = vector.broadcast %13 : vector<16x1xf32> to vector<16x32xf32>
    %15 = arith.mulf %7, %14 : vector<16x32xf32>
    %c0_9 = arith.constant 0 : index
    %c0_10 = arith.constant 0 : index
    %c0_11 = arith.constant 0 : index
    %16 = vector.load %arg1[%c0_9, %c0_10, %c0_11] : memref<1x12x32xf32, #tpu.memory_space<vmem>>, vector<1x12x32xf32>
    %17 = vector.shape_cast %16 : vector<1x12x32xf32> to vector<12x32xf32>
    %18 = vector.extract_strided_slice %0 {offsets = [0, 0], sizes = [32, 192], strides = [1, 1]} : vector<32x800xbf16> to vector<32x192xbf16>
    %19 = arith.truncf %17 : vector<12x32xf32> to vector<12x32xbf16>
    %cst_12 = arith.constant dense<0.000000e+00> : vector<12x192xf32>
    %20 = tpu.matmul %19, %18, %cst_12 {dimension_numbers = #tpu.dot_dimension_numbers<[1], [0], [0], [1], [0, 0, 1, 1], [], []>} : vector<12x32xbf16>, vector<32x192xbf16>, vector<12x192xf32> -> vector<12x192xf32>
    %21 = vector.extract_strided_slice %1 {offsets = [0, 0], sizes = [1, 192], strides = [1, 1]} : vector<16x192xf32> to vector<1x192xf32>
    %22 = vector.broadcast %21 : vector<1x192xf32> to vector<12x192xf32>
    %23 = arith.addf %20, %22 : vector<12x192xf32>
    %24 = vector.extract_strided_slice %23 {offsets = [0, 0], sizes = [12, 32], strides = [1, 1]} : vector<12x192xf32> to vector<12x32xf32>
    %25 = vector.extract_strided_slice %23 {offsets = [0, 32], sizes = [12, 32], strides = [1, 1]} : vector<12x192xf32> to vector<12x32xf32>
    %26 = vector.extract_strided_slice %23 {offsets = [0, 64], sizes = [12, 128], strides = [1, 1]} : vector<12x192xf32> to vector<12x128xf32>
    %27 = vector.extract_strided_slice %1 {offsets = [1, 0], sizes = [1, 32], strides = [1, 1]} : vector<16x192xf32> to vector<1x32xf32>
    %28 = tpu.concatenate %24, %24, %24, %24 in 0 : vector<12x32xf32>, vector<12x32xf32>, vector<12x32xf32>, vector<12x32xf32> -> vector<48x32xf32>
    %29 = arith.mulf %28, %3 : vector<48x32xf32>
    %30 = arith.truncf %29 : vector<48x32xf32> to vector<48x32xbf16>
    %31 = arith.truncf %25 : vector<12x32xf32> to vector<12x32xbf16>
    %cst_13 = arith.constant dense<0.000000e+00> : vector<48x12xf32>
    %32 = tpu.matmul %30, %31, %cst_13 {dimension_numbers = #tpu.dot_dimension_numbers<[1], [1], [0], [0], [0, 0, 1, 0], [], []>} : vector<48x32xbf16>, vector<12x32xbf16>, vector<48x12xf32> -> vector<48x12xf32>
    %33 = arith.addf %32, %4 : vector<48x12xf32>
    %cst_14 = arith.constant dense<0xFF800000> : vector<48xf32>
    %34 = vector.multi_reduction <maximumf>, %33, %cst_14 [1] : vector<48x12xf32> to vector<48xf32>
    %35 = vector.shape_cast %34 : vector<48xf32> to vector<48x1xf32>
    %36 = vector.broadcast %35 : vector<48x1xf32> to vector<48x12xf32>
    %37 = arith.subf %33, %36 : vector<48x12xf32>
    %38 = math.exp %37 : vector<48x12xf32>
    %cst_15 = arith.constant dense<0.000000e+00> : vector<48xf32>
    %39 = vector.multi_reduction <add>, %38, %cst_15 [1] : vector<48x12xf32> to vector<48xf32>
    %40 = vector.shape_cast %39 : vector<48xf32> to vector<48x1xf32>
    %41 = vector.broadcast %40 : vector<48x1xf32> to vector<48x12xf32>
    %42 = arith.divf %38, %41 : vector<48x12xf32>
    %43 = arith.truncf %42 : vector<48x12xf32> to vector<48x12xbf16>
    %44 = arith.truncf %26 : vector<12x128xf32> to vector<12x128xbf16>
    %cst_16 = arith.constant dense<0.000000e+00> : vector<48x128xf32>
    %45 = tpu.matmul %43, %44, %cst_16 {dimension_numbers = #tpu.dot_dimension_numbers<[1], [0], [0], [1], [0, 0, 1, 1], [], []>} : vector<48x12xbf16>, vector<12x128xbf16>, vector<48x128xf32> -> vector<48x128xf32>
    %46 = vector.extract_strided_slice %45 {offsets = [0, 0], sizes = [12, 32], strides = [1, 1]} : vector<48x128xf32> to vector<12x32xf32>
    %47 = vector.broadcast %27 : vector<1x32xf32> to vector<12x32xf32>
    %48 = arith.addf %47, %46 : vector<12x32xf32>
    %49 = vector.extract_strided_slice %45 {offsets = [12, 32], sizes = [12, 32], strides = [1, 1]} : vector<48x128xf32> to vector<12x32xf32>
    %50 = arith.addf %48, %49 : vector<12x32xf32>
    %51 = vector.extract_strided_slice %45 {offsets = [24, 64], sizes = [12, 32], strides = [1, 1]} : vector<48x128xf32> to vector<12x32xf32>
    %52 = arith.addf %50, %51 : vector<12x32xf32>
    %53 = vector.extract_strided_slice %45 {offsets = [36, 96], sizes = [12, 32], strides = [1, 1]} : vector<48x128xf32> to vector<12x32xf32>
    %54 = arith.addf %52, %53 : vector<12x32xf32>
    %55 = arith.addf %17, %54 : vector<12x32xf32>
    %56 = vector.extract_strided_slice %1 {offsets = [5, 0], sizes = [1, 32], strides = [1, 1]} : vector<16x192xf32> to vector<1x32xf32>
    %57 = vector.extract_strided_slice %1 {offsets = [6, 0], sizes = [1, 32], strides = [1, 1]} : vector<16x192xf32> to vector<1x32xf32>
    %cst_17 = arith.constant dense<0.000000e+00> : vector<12xf32>
    %58 = vector.multi_reduction <add>, %55, %cst_17 [1] : vector<12x32xf32> to vector<12xf32>
    %59 = vector.shape_cast %58 : vector<12xf32> to vector<12x1xf32>
    %cst_18 = arith.constant 3.200000e+01 : f32
    %60 = vector.broadcast %cst_18 : f32 to vector<12x1xf32>
    %61 = arith.divf %59, %60 : vector<12x1xf32>
    %62 = vector.broadcast %61 : vector<12x1xf32> to vector<12x32xf32>
    %63 = arith.subf %55, %62 : vector<12x32xf32>
    %64 = arith.mulf %63, %63 : vector<12x32xf32>
    %cst_19 = arith.constant dense<0.000000e+00> : vector<12xf32>
    %65 = vector.multi_reduction <add>, %64, %cst_19 [1] : vector<12x32xf32> to vector<12xf32>
    %66 = vector.shape_cast %65 : vector<12xf32> to vector<12x1xf32>
    %cst_20 = arith.constant 3.200000e+01 : f32
    %67 = vector.broadcast %cst_20 : f32 to vector<12x1xf32>
    %68 = arith.divf %66, %67 : vector<12x1xf32>
    %69 = vector.broadcast %61 : vector<12x1xf32> to vector<12x32xf32>
    %70 = arith.subf %55, %69 : vector<12x32xf32>
    %cst_21 = arith.constant 9.99999974E-6 : f32
    %71 = vector.broadcast %cst_21 : f32 to vector<12x1xf32>
    %72 = arith.addf %68, %71 : vector<12x1xf32>
    %73 = math.rsqrt %72 : vector<12x1xf32>
    %74 = vector.broadcast %73 : vector<12x1xf32> to vector<12x32xf32>
    %75 = arith.mulf %70, %74 : vector<12x32xf32>
    %76 = vector.broadcast %56 : vector<1x32xf32> to vector<12x32xf32>
    %77 = arith.mulf %75, %76 : vector<12x32xf32>
    %78 = vector.broadcast %57 : vector<1x32xf32> to vector<12x32xf32>
    %79 = arith.addf %77, %78 : vector<12x32xf32>
    %80 = vector.extract_strided_slice %0 {offsets = [0, 192], sizes = [32, 32], strides = [1, 1]} : vector<32x800xbf16> to vector<32x32xbf16>
    %81 = arith.truncf %79 : vector<12x32xf32> to vector<12x32xbf16>
    %cst_22 = arith.constant dense<0.000000e+00> : vector<12x32xf32>
    %82 = tpu.matmul %81, %80, %cst_22 {dimension_numbers = #tpu.dot_dimension_numbers<[1], [0], [0], [1], [0, 0, 1, 1], [], []>} : vector<12x32xbf16>, vector<32x32xbf16>, vector<12x32xf32> -> vector<12x32xf32>
    %83 = vector.extract_strided_slice %1 {offsets = [2, 0], sizes = [1, 32], strides = [1, 1]} : vector<16x192xf32> to vector<1x32xf32>
    %84 = vector.broadcast %83 : vector<1x32xf32> to vector<12x32xf32>
    %85 = arith.addf %82, %84 : vector<12x32xf32>
    %86 = vector.extract_strided_slice %0 {offsets = [0, 224], sizes = [32, 160], strides = [1, 1]} : vector<32x800xbf16> to vector<32x160xbf16>
    %87 = arith.truncf %15 : vector<16x32xf32> to vector<16x32xbf16>
    %cst_23 = arith.constant dense<0.000000e+00> : vector<16x160xf32>
    %88 = tpu.matmul %87, %86, %cst_23 {dimension_numbers = #tpu.dot_dimension_numbers<[1], [0], [0], [1], [0, 0, 1, 1], [], []>} : vector<16x32xbf16>, vector<32x160xbf16>, vector<16x160xf32> -> vector<16x160xf32>
    %89 = vector.extract_strided_slice %1 {offsets = [3, 0], sizes = [1, 160], strides = [1, 1]} : vector<16x192xf32> to vector<1x160xf32>
    %90 = vector.broadcast %89 : vector<1x160xf32> to vector<16x160xf32>
    %91 = arith.addf %88, %90 : vector<16x160xf32>
    %92 = vector.extract_strided_slice %91 {offsets = [0, 0], sizes = [16, 32], strides = [1, 1]} : vector<16x160xf32> to vector<16x32xf32>
    %93 = vector.extract_strided_slice %91 {offsets = [0, 32], sizes = [16, 128], strides = [1, 1]} : vector<16x160xf32> to vector<16x128xf32>
    %94 = vector.extract_strided_slice %1 {offsets = [4, 0], sizes = [1, 32], strides = [1, 1]} : vector<16x192xf32> to vector<1x32xf32>
    %95 = tpu.concatenate %85, %85, %85, %85 in 0 : vector<12x32xf32>, vector<12x32xf32>, vector<12x32xf32>, vector<12x32xf32> -> vector<48x32xf32>
    %96 = arith.mulf %95, %3 : vector<48x32xf32>
    %97 = arith.truncf %96 : vector<48x32xf32> to vector<48x32xbf16>
    %98 = arith.truncf %92 : vector<16x32xf32> to vector<16x32xbf16>
    %cst_24 = arith.constant dense<0.000000e+00> : vector<48x16xf32>
    %99 = tpu.matmul %97, %98, %cst_24 {dimension_numbers = #tpu.dot_dimension_numbers<[1], [1], [0], [0], [0, 0, 1, 0], [], []>} : vector<48x32xbf16>, vector<16x32xbf16>, vector<48x16xf32> -> vector<48x16xf32>
    %100 = arith.addf %99, %5 : vector<48x16xf32>
    %cst_25 = arith.constant dense<0xFF800000> : vector<48xf32>
    %101 = vector.multi_reduction <maximumf>, %100, %cst_25 [1] : vector<48x16xf32> to vector<48xf32>
    %102 = vector.shape_cast %101 : vector<48xf32> to vector<48x1xf32>
    %103 = vector.broadcast %102 : vector<48x1xf32> to vector<48x16xf32>
    %104 = arith.subf %100, %103 : vector<48x16xf32>
    %105 = math.exp %104 : vector<48x16xf32>
    %cst_26 = arith.constant dense<0.000000e+00> : vector<48xf32>
    %106 = vector.multi_reduction <add>, %105, %cst_26 [1] : vector<48x16xf32> to vector<48xf32>
    %107 = vector.shape_cast %106 : vector<48xf32> to vector<48x1xf32>
    %108 = vector.broadcast %107 : vector<48x1xf32> to vector<48x16xf32>
    %109 = arith.divf %105, %108 : vector<48x16xf32>
    %110 = arith.truncf %109 : vector<48x16xf32> to vector<48x16xbf16>
    %111 = arith.truncf %93 : vector<16x128xf32> to vector<16x128xbf16>
    %cst_27 = arith.constant dense<0.000000e+00> : vector<48x128xf32>
    %112 = tpu.matmul %110, %111, %cst_27 {dimension_numbers = #tpu.dot_dimension_numbers<[1], [0], [0], [1], [0, 0, 1, 1], [], []>} : vector<48x16xbf16>, vector<16x128xbf16>, vector<48x128xf32> -> vector<48x128xf32>
    %113 = vector.extract_strided_slice %112 {offsets = [0, 0], sizes = [12, 32], strides = [1, 1]} : vector<48x128xf32> to vector<12x32xf32>
    %114 = vector.broadcast %94 : vector<1x32xf32> to vector<12x32xf32>
    %115 = arith.addf %114, %113 : vector<12x32xf32>
    %116 = vector.extract_strided_slice %112 {offsets = [12, 32], sizes = [12, 32], strides = [1, 1]} : vector<48x128xf32> to vector<12x32xf32>
    %117 = arith.addf %115, %116 : vector<12x32xf32>
    %118 = vector.extract_strided_slice %112 {offsets = [24, 64], sizes = [12, 32], strides = [1, 1]} : vector<48x128xf32> to vector<12x32xf32>
    %119 = arith.addf %117, %118 : vector<12x32xf32>
    %120 = vector.extract_strided_slice %112 {offsets = [36, 96], sizes = [12, 32], strides = [1, 1]} : vector<48x128xf32> to vector<12x32xf32>
    %121 = arith.addf %119, %120 : vector<12x32xf32>
    %122 = arith.addf %79, %121 : vector<12x32xf32>
    %123 = vector.extract_strided_slice %1 {offsets = [7, 0], sizes = [1, 32], strides = [1, 1]} : vector<16x192xf32> to vector<1x32xf32>
    %124 = vector.extract_strided_slice %1 {offsets = [8, 0], sizes = [1, 32], strides = [1, 1]} : vector<16x192xf32> to vector<1x32xf32>
    %cst_28 = arith.constant dense<0.000000e+00> : vector<12xf32>
    %125 = vector.multi_reduction <add>, %122, %cst_28 [1] : vector<12x32xf32> to vector<12xf32>
    %126 = vector.shape_cast %125 : vector<12xf32> to vector<12x1xf32>
    %cst_29 = arith.constant 3.200000e+01 : f32
    %127 = vector.broadcast %cst_29 : f32 to vector<12x1xf32>
    %128 = arith.divf %126, %127 : vector<12x1xf32>
    %129 = vector.broadcast %128 : vector<12x1xf32> to vector<12x32xf32>
    %130 = arith.subf %122, %129 : vector<12x32xf32>
    %131 = arith.mulf %130, %130 : vector<12x32xf32>
    %cst_30 = arith.constant dense<0.000000e+00> : vector<12xf32>
    %132 = vector.multi_reduction <add>, %131, %cst_30 [1] : vector<12x32xf32> to vector<12xf32>
    %133 = vector.shape_cast %132 : vector<12xf32> to vector<12x1xf32>
    %cst_31 = arith.constant 3.200000e+01 : f32
    %134 = vector.broadcast %cst_31 : f32 to vector<12x1xf32>
    %135 = arith.divf %133, %134 : vector<12x1xf32>
    %136 = vector.broadcast %128 : vector<12x1xf32> to vector<12x32xf32>
    %137 = arith.subf %122, %136 : vector<12x32xf32>
    %cst_32 = arith.constant 9.99999974E-6 : f32
    %138 = vector.broadcast %cst_32 : f32 to vector<12x1xf32>
    %139 = arith.addf %135, %138 : vector<12x1xf32>
    %140 = math.rsqrt %139 : vector<12x1xf32>
    %141 = vector.broadcast %140 : vector<12x1xf32> to vector<12x32xf32>
    %142 = arith.mulf %137, %141 : vector<12x32xf32>
    %143 = vector.broadcast %123 : vector<1x32xf32> to vector<12x32xf32>
    %144 = arith.mulf %142, %143 : vector<12x32xf32>
    %145 = vector.broadcast %124 : vector<1x32xf32> to vector<12x32xf32>
    %146 = arith.addf %144, %145 : vector<12x32xf32>
    %147 = vector.extract_strided_slice %0 {offsets = [0, 384], sizes = [32, 128], strides = [1, 1]} : vector<32x800xbf16> to vector<32x128xbf16>
    %148 = arith.truncf %146 : vector<12x32xf32> to vector<12x32xbf16>
    %cst_33 = arith.constant dense<0.000000e+00> : vector<12x128xf32>
    %149 = tpu.matmul %148, %147, %cst_33 {dimension_numbers = #tpu.dot_dimension_numbers<[1], [0], [0], [1], [0, 0, 1, 1], [], []>} : vector<12x32xbf16>, vector<32x128xbf16>, vector<12x128xf32> -> vector<12x128xf32>
    %150 = vector.extract_strided_slice %1 {offsets = [11, 0], sizes = [1, 128], strides = [1, 1]} : vector<16x192xf32> to vector<1x128xf32>
    %151 = vector.broadcast %150 : vector<1x128xf32> to vector<12x128xf32>
    %152 = arith.addf %149, %151 : vector<12x128xf32>
    %cst_34 = arith.constant 0.000000e+00 : f32
    %153 = vector.broadcast %cst_34 : f32 to vector<12x128xf32>
    %154 = arith.maximumf %152, %153 : vector<12x128xf32>
    %155 = vector.extract_strided_slice %0 {offsets = [0, 512], sizes = [32, 128], strides = [1, 1]} : vector<32x800xbf16> to vector<32x128xbf16>
    %156 = arith.truncf %154 : vector<12x128xf32> to vector<12x128xbf16>
    %cst_35 = arith.constant dense<0.000000e+00> : vector<12x32xf32>
    %157 = tpu.matmul %156, %155, %cst_35 {dimension_numbers = #tpu.dot_dimension_numbers<[1], [1], [0], [0], [0, 0, 1, 0], [], []>} : vector<12x128xbf16>, vector<32x128xbf16>, vector<12x32xf32> -> vector<12x32xf32>
    %158 = vector.extract_strided_slice %1 {offsets = [12, 0], sizes = [1, 32], strides = [1, 1]} : vector<16x192xf32> to vector<1x32xf32>
    %159 = vector.broadcast %158 : vector<1x32xf32> to vector<12x32xf32>
    %160 = arith.addf %157, %159 : vector<12x32xf32>
    %161 = arith.addf %146, %160 : vector<12x32xf32>
    %162 = vector.extract_strided_slice %1 {offsets = [9, 0], sizes = [1, 32], strides = [1, 1]} : vector<16x192xf32> to vector<1x32xf32>
    %163 = vector.extract_strided_slice %1 {offsets = [10, 0], sizes = [1, 32], strides = [1, 1]} : vector<16x192xf32> to vector<1x32xf32>
    %cst_36 = arith.constant dense<0.000000e+00> : vector<12xf32>
    %164 = vector.multi_reduction <add>, %161, %cst_36 [1] : vector<12x32xf32> to vector<12xf32>
    %165 = vector.shape_cast %164 : vector<12xf32> to vector<12x1xf32>
    %cst_37 = arith.constant 3.200000e+01 : f32
    %166 = vector.broadcast %cst_37 : f32 to vector<12x1xf32>
    %167 = arith.divf %165, %166 : vector<12x1xf32>
    %168 = vector.broadcast %167 : vector<12x1xf32> to vector<12x32xf32>
    %169 = arith.subf %161, %168 : vector<12x32xf32>
    %170 = arith.mulf %169, %169 : vector<12x32xf32>
    %cst_38 = arith.constant dense<0.000000e+00> : vector<12xf32>
    %171 = vector.multi_reduction <add>, %170, %cst_38 [1] : vector<12x32xf32> to vector<12xf32>
    %172 = vector.shape_cast %171 : vector<12xf32> to vector<12x1xf32>
    %cst_39 = arith.constant 3.200000e+01 : f32
    %173 = vector.broadcast %cst_39 : f32 to vector<12x1xf32>
    %174 = arith.divf %172, %173 : vector<12x1xf32>
    %175 = vector.broadcast %167 : vector<12x1xf32> to vector<12x32xf32>
    %176 = arith.subf %161, %175 : vector<12x32xf32>
    %cst_40 = arith.constant 9.99999974E-6 : f32
    %177 = vector.broadcast %cst_40 : f32 to vector<12x1xf32>
    %178 = arith.addf %174, %177 : vector<12x1xf32>
    %179 = math.rsqrt %178 : vector<12x1xf32>
    %180 = vector.broadcast %179 : vector<12x1xf32> to vector<12x32xf32>
    %181 = arith.mulf %176, %180 : vector<12x32xf32>
    %182 = vector.broadcast %162 : vector<1x32xf32> to vector<12x32xf32>
    %183 = arith.mulf %181, %182 : vector<12x32xf32>
    %184 = vector.broadcast %163 : vector<1x32xf32> to vector<12x32xf32>
    %185 = arith.addf %183, %184 : vector<12x32xf32>
    %186 = vector.extract_strided_slice %185 {offsets = [0, 0], sizes = [6, 32], strides = [1, 1]} : vector<12x32xf32> to vector<6x32xf32>
    %cst_41 = arith.constant dense<0xFF800000> : vector<32xf32>
    %187 = vector.multi_reduction <maximumf>, %186, %cst_41 [0] : vector<6x32xf32> to vector<32xf32>
    %188 = vector.shape_cast %187 : vector<32xf32> to vector<1x32xf32>
    %189 = vector.extract_strided_slice %185 {offsets = [6, 0], sizes = [6, 32], strides = [1, 1]} : vector<12x32xf32> to vector<6x32xf32>
    %cst_42 = arith.constant dense<0xFF800000> : vector<32xf32>
    %190 = vector.multi_reduction <maximumf>, %189, %cst_42 [0] : vector<6x32xf32> to vector<32xf32>
    %191 = vector.shape_cast %190 : vector<32xf32> to vector<1x32xf32>
    %192 = tpu.concatenate %188, %191 in 0 : vector<1x32xf32>, vector<1x32xf32> -> vector<2x32xf32>
    %193 = vector.extract_strided_slice %0 {offsets = [0, 640], sizes = [32, 32], strides = [1, 1]} : vector<32x800xbf16> to vector<32x32xbf16>
    %194 = arith.truncf %192 : vector<2x32xf32> to vector<2x32xbf16>
    %cst_43 = arith.constant dense<0.000000e+00> : vector<2x32xf32>
    %195 = tpu.matmul %194, %193, %cst_43 {dimension_numbers = #tpu.dot_dimension_numbers<[1], [0], [0], [1], [0, 0, 1, 1], [], []>} : vector<2x32xbf16>, vector<32x32xbf16>, vector<2x32xf32> -> vector<2x32xf32>
    %196 = vector.extract_strided_slice %1 {offsets = [13, 0], sizes = [1, 32], strides = [1, 1]} : vector<16x192xf32> to vector<1x32xf32>
    %197 = vector.broadcast %196 : vector<1x32xf32> to vector<2x32xf32>
    %198 = arith.addf %195, %197 : vector<2x32xf32>
    %cst_44 = arith.constant 0.000000e+00 : f32
    %199 = vector.broadcast %cst_44 : f32 to vector<2x32xf32>
    %200 = arith.maximumf %198, %199 : vector<2x32xf32>
    %201 = vector.extract_strided_slice %0 {offsets = [0, 672], sizes = [32, 128], strides = [1, 1]} : vector<32x800xbf16> to vector<32x128xbf16>
    %202 = arith.truncf %200 : vector<2x32xf32> to vector<2x32xbf16>
    %cst_45 = arith.constant dense<0.000000e+00> : vector<2x128xf32>
    %203 = tpu.matmul %202, %201, %cst_45 {dimension_numbers = #tpu.dot_dimension_numbers<[1], [0], [0], [1], [0, 0, 1, 1], [], []>} : vector<2x32xbf16>, vector<32x128xbf16>, vector<2x128xf32> -> vector<2x128xf32>
    %204 = vector.extract_strided_slice %1 {offsets = [14, 0], sizes = [1, 128], strides = [1, 1]} : vector<16x192xf32> to vector<1x128xf32>
    %205 = vector.broadcast %204 : vector<1x128xf32> to vector<2x128xf32>
    %206 = arith.addf %203, %205 : vector<2x128xf32>
    %c0_46 = arith.constant 0 : index
    %c0_47 = arith.constant 0 : index
    %c0_48 = arith.constant 0 : index
    %207 = vector.load %arg6[%c0_46, %c0_47, %c0_48] : memref<1x2x128xf32, #tpu.memory_space<vmem>>, vector<1x2x128xf32>
    %208 = vector.shape_cast %207 : vector<1x2x128xf32> to vector<2x128xf32>
    %209 = vector.shape_cast %206 : vector<2x128xf32> to vector<1x2x128xf32>
    tpu.vector_store %arg6[%c0_46, %c0_47, %c0_48], %209 {strides = array<i32>} : memref<1x2x128xf32, #tpu.memory_space<vmem>>, vector<1x2x128xf32>,
    return
  }
  func.func @transform_0(%arg0: i32) -> (i32, i32, i32) {
    %c0_i32 = arith.constant 0 : i32
    %c0_i32_0 = arith.constant 0 : i32
    %c0_i32_1 = arith.constant 0 : i32
    return %arg0, %c0_i32, %c0_i32_0 : i32, i32, i32
  }
  func.func @transform_1(%arg0: i32) -> (i32, i32, i32) {
    %c0_i32 = arith.constant 0 : i32
    %c0_i32_0 = arith.constant 0 : i32
    %c0_i32_1 = arith.constant 0 : i32
    return %arg0, %c0_i32, %c0_i32_0 : i32, i32, i32
  }
  func.func @transform_2(%arg0: i32) -> (i32, i32) {
    %c0_i32 = arith.constant 0 : i32
    %c0_i32_0 = arith.constant 0 : i32
    %c0_i32_1 = arith.constant 0 : i32
    return %c0_i32, %c0_i32_0 : i32, i32
  }
  func.func @transform_3(%arg0: i32) -> (i32, i32) {
    %c0_i32 = arith.constant 0 : i32
    %c0_i32_0 = arith.constant 0 : i32
    %c0_i32_1 = arith.constant 0 : i32
    return %c0_i32, %c0_i32_0 : i32, i32
  }
  func.func @transform_4(%arg0: i32) -> (i32, i32) {
    %c0_i32 = arith.constant 0 : i32
    %c0_i32_0 = arith.constant 0 : i32
    %c0_i32_1 = arith.constant 0 : i32
    return %c0_i32, %c0_i32_0 : i32, i32
  }
  func.func @transform_5(%arg0: i32) -> (i32, i32, i32) {
    %c0_i32 = arith.constant 0 : i32
    %c0_i32_0 = arith.constant 0 : i32
    %c0_i32_1 = arith.constant 0 : i32
    return %arg0, %c0_i32, %c0_i32_0 : i32, i32, i32
  }
}

</mosaic_0001>

<llo_original>
// kernel: forward.1
$region0: #{forward.1}
  #allocation0 [shape = 'u32[]', space=smem, size = 0x4, offset = 0x4, fixed_abs, tag = 'smem constant byte address 0x4 - core index']
  #allocation1 [shape = 'u32[144,128]{1,0:T(1,128)}', space=vmem, size = 0x12000, scoped, tag = 'internal scratch']
  %s0 = inlined_call_operand.vmem [shape: f32[1,12,32], index: 0, kind: input, shape index: {}]
  %s1 = inlined_call_operand.vmem [shape: f32[1,16,32], index: 1, kind: input, shape index: {}]
  %s2 = inlined_call_operand.vmem [shape: f32[48,60], index: 2, kind: input, shape index: {}]
  %s3 = inlined_call_operand.vmem [shape: bf16[32,800], index: 3, kind: input, shape index: {}]
  %s4 = inlined_call_operand.vmem [shape: f32[16,192], index: 4, kind: input, shape index: {}]
  %s5 = inlined_call_operand.hbm [shape: f32[1,2,128], index: 5, kind: output, shape index: {}]
  %s6 = sld [smem:[#allocation0]]
  $region30: #{forward.1} parent=0
    _
  %s8 = ssub.s32 1, %s6
  %s9 = scalar_select 0, %s8, %s6
  $region1: #{forward.1} parent=0
    #allocation2 [shape = 'u8[1024]{0}', space=vmem, size = 0x400, scoped, tag = 'output window, operand 0, single buffered']
    #allocation3 [shape = 's32[1]{0}', space=sflag, size = 0x4, scoped, tag = 'scoped memory for forward.1']
    %10 = vsyncpa [#allocation3], 0
    // Predicated region
    $region2: #{forward.1} parent=1 // pred_check
      _
    $region3: #{forward.1} parent=1 // pred_check_branch
      %12 = sbr.rel (0) target = $region5
    $region4: #{forward.1} parent=1 // pred_region
      _
    $region5: #{forward.1} parent=1 // pred_fallthru
      _
    // Predicated region
    $region6: #{forward.1} parent=1 // pred_check
      _
    $region7: #{forward.1} parent=1 // pred_check_branch
      %14 = sbr.rel (0) target = $region9
    $region8: #{forward.1} parent=1 // pred_region
      _
    $region9: #{forward.1} parent=1 // pred_fallthru
      _
    // Predicated region
    $region10: #{forward.1} parent=1 // pred_check
      _
    $region11: #{forward.1} parent=1 // pred_check_branch
      %16 = sbr.rel (0) target = $region13
    $region12: #{forward.1} parent=1 // pred_region
      _
    $region13: #{forward.1} parent=1 // pred_fallthru
      _
    // Predicated region
    $region14: #{forward.1} parent=1 // pred_check
      _
    $region15: #{forward.1} parent=1 // pred_check_branch
      %18 = sbr.rel (0) target = $region17
    $region16: #{forward.1} parent=1 // pred_region
      _
    $region17: #{forward.1} parent=1 // pred_fallthru
      _
    // Predicated region
    $region18: #{forward.1} parent=1 // pred_check
      _
    $region19: #{forward.1} parent=1 // pred_check_branch
      %20 = sbr.rel (0) target = $region21
    $region20: #{forward.1} parent=1 // pred_region
      _
    $region21: #{forward.1} parent=1 // pred_fallthru
      _
    %v22 = vld [vmem:[%s3] sm:$0xff]
    %v23 = vld [vmem:[%s3 + $0x8] sm:$0xff]
    %v24 = vld [vmem:[%s3 + $0x10] sm:$0xff]
    %v25 = vld [vmem:[%s3 + $0x18] sm:$0xf]
    %v26 = vld [vmem:[%s3 + $0x1c] sm:$0xff]
    %v27 = vld [vmem:[%s3 + $0x24] sm:$0xff]
    %v28 = vld [vmem:[%s3 + $0x2c] sm:$0xff]
    %v29 = vld [vmem:[%s3 + $0x34] sm:$0xf]
    %v30 = vld [vmem:[%s3 + $0x38] sm:$0xff]
    %v31 = vld [vmem:[%s3 + $0x40] sm:$0xff]
    %v32 = vld [vmem:[%s3 + $0x48] sm:$0xff]
    %v33 = vld [vmem:[%s3 + $0x50] sm:$0xf]
    %v34 = vld [vmem:[%s3 + $0x54] sm:$0xff]
    %v35 = vld [vmem:[%s3 + $0x5c] sm:$0xff]
    %v36 = vld [vmem:[%s3 + $0x64] sm:$0xff]
    %v37 = vld [vmem:[%s3 + $0x6c] sm:$0xf]
    %v38 = vld [vmem:[%s4] sm:$0xff]
    %v39 = vld [vmem:[%s4 + $0x8] sm:$0xff]
    %v40 = vld [vmem:[%s4 + $0x10] sm:$0xff]
    %v41 = vld [vmem:[%s2] sm:$0xff]
    %v42 = vld [vmem:[%s2 + $0x8] sm:$0xff]
    %v43 = vld [vmem:[%s2 + $0x10] sm:$0xff]
    %v44 = vld [vmem:[%s2 + $0x18] sm:$0xff]
    %v45 = vld [vmem:[%s2 + $0x20] sm:$0xff]
    %v46 = vld [vmem:[%s2 + $0x28] sm:$0xff]
    %v47 = vld [vmem:[%s1] sm:$0xff]
    %v48 = vld [vmem:[%s1 + $0x8] sm:$0xff]
    %v49 = vmul.f32 %v47, %v47
    %v50 = vmul.f32 %v48, %v48
    %vm51 = vcmask 261120
    %v52 = vsel %vm51, %v49, 0.0
    %53 = vadd.xlane.f32.xlu0 %v52
    %v54 = vpop.xlane.xlu0 %53
    %v55 = vsel %vm51, %v50, 0.0
    %56 = vadd.xlane.f32.xlu0 %v55
    %v57 = vpop.xlane.xlu0 %56
    %v58 = vmax.f32 %v54, 1e-24
    %v59 = vmax.f32 %v57, 1e-24
    %v60 = vrsqrt.pop %v58
    %v61 = vrsqrt.pop %v59
    %v62 = vmul.f32 %v47, %v60
    %v63 = vmul.f32 %v48, %v61
    %v64 = vld [vmem:[%s0] sm:$0xff]
    %v65 = vld [vmem:[%s0 + $0x8] sm:$0xf]
    %v66 = vpack.c.bf16 %v65, %v64
    %v67 = vlaneseq
    %v68 = vshrl.u32 %v67, 7
    %v69 = vsub.s32 0, %v68
    %v70 = vrot.slane %v38, %v69
    %v71 = vlaneseq
    %v72 = vshrl.u32 %v71, 7
    %v73 = vsub.s32 0, %v72
    %v74 = vrot.slane %v39, %v73
    %v79 = vunpack.c.l.b16 %v22
    %v80 = vunpack.c.h.b16 %v22
    %v81 = vunpack.c.l.b16 %v26
    %v82 = vunpack.c.h.b16 %v26
    %v83 = vunpack.c.l.b16 %v30
    %v84 = vunpack.c.h.b16 %v30
    %v85 = vunpack.c.l.b16 %v34
    %v86 = vunpack.c.h.b16 %v34
    %v87 = vpack.c.b16 %v81, %v79
    %v88 = vpack.c.b16 %v82, %v80
    %v89 = vpack.c.b16 %v85, %v83
    %v90 = vpack.c.b16 %v86, %v84
    %v96 = vsel %vm51, %v66, 0
    %98 = vmatprep.subr.bf16.mxu0 %v88
    %99 = vmatpush1.bf16.msra.mxu0 %v87
    %100 = vmatprep.subr.bf16.mxu0 %v90
    %101 = vmatpush1.bf16.msra.mxu0 %v89
    %102 = vmatprep.subr.bf16.mxu0 0
    %103 = vmatpush1.bf16.msra.mxu0 0
    %104 = vmatprep.subr.bf16.mxu0 0
    %105 = vmatpush1.bf16.msra.mxu0 0
    %106 = vmatprep.subr.bf16.mxu0 0
    %107 = vmatpush1.bf16.msra.mxu0 0
    %108 = vmatprep.subr.bf16.mxu0 0
    %109 = vmatpush1.bf16.msra.mxu0 0
    %110 = vmatprep.subr.bf16.mxu0 0
    %111 = vmatpush1.bf16.msra.mxu0 0
    %112 = vmatprep.subr.bf16.mxu0 0
    %113 = vmatpush1.bf16.msra.mxu0 0
    %114 = vmatprep.subr.bf16.mxu0 0
    %115 = vmatpush1.bf16.msra.mxu0 0
    %116 = vmatprep.subr.bf16.mxu0 0
    %117 = vmatpush1.bf16.msra.mxu0 0
    %118 = vmatprep.subr.bf16.mxu0 0
    %119 = vmatpush1.bf16.msra.mxu0 0
    %120 = vmatprep.subr.bf16.mxu0 0
    %121 = vmatpush1.bf16.msra.mxu0 0
    %122 = vmatprep.subr.bf16.mxu0 0
    %123 = vmatpush1.bf16.msra.mxu0 0
    %124 = vmatprep.subr.bf16.mxu0 0
    %125 = vmatpush1.bf16.msra.mxu0 0
    %126 = vmatprep.subr.bf16.mxu0 0
    %127 = vmatpush1.bf16.msra.mxu0 0
    %128 = vmatprep.subr.bf16.mxu0 0
    %129 = vmatpush1.bf16.msra.mxu0 0
    %130 = vmatprep.mubr.bf16.mxu0 0
    %131 = vmatmul.mubr.bf16.gmra.mrb[0].mxu0 %v96
    %v132 = vpop.f32.mrb[0].mxu0
    %v133 = vadd.f32 %v70, %v132
    %v134 = vpop.f32.mrb[0].mxu0
    %v135 = vadd.f32 %v74, %v134
    %v136 = vpop.f32.mrb[0].mxu0
    %v137 = vadd.f32 %v70, %v136
    %v138 = vpop.f32.mrb[0].mxu0
    %v139 = vadd.f32 %v74, %v138
    %140 = vdwg.mxu0
    %vm143 = vcmask 1043456
    %v144 = vrot.slane %v133, 4
    %v145 = vrot.slane %v137, 4
    %v146 = vsel %vm143, %v144, %v145
    %v149 = vsel %vm143, %v137, %v144
    %v150 = vmul.f32 %v133, %v41
    %v151 = vmul.f32 %v149, %v42
    %v152 = vmul.f32 %v146, %v43
    %v153 = vmul.f32 %v133, %v44
    %v154 = vmul.f32 %v149, %v45
    %v155 = vmul.f32 %v146, %v46
    %v156 = vpack.c.bf16 %v151, %v150
    %v157 = vpack.c.bf16 %v153, %v152
    %v158 = vpack.c.bf16 %v155, %v154
    %v159 = vpack.c.bf16 %v137, %v133
    %161 = vrot.lane.b32.xlu0 %v159, 96
    %v162 = vpop.permute.xlu0 %161
    %169 = vrot.lane.b32.xlu0 %v41, 96
    %v170 = vpop.permute.xlu0 %169
    %171 = vrot.lane.b32.xlu0 %v42, 96
    %v172 = vpop.permute.xlu0 %171
    %173 = vrot.lane.b32.xlu0 %v43, 96
    %v174 = vpop.permute.xlu0 %173
    %175 = vrot.lane.b32.xlu0 %v44, 96
    %v176 = vpop.permute.xlu0 %175
    %177 = vrot.lane.b32.xlu0 %v45, 96
    %v178 = vpop.permute.xlu0 %177
    %179 = vrot.lane.b32.xlu0 %v46, 96
    %v180 = vpop.permute.xlu0 %179
    %v188 = vsel %vm51, %v156, 0
    %v191 = vsel %vm51, %v157, 0
    %v194 = vsel %vm51, %v158, 0
    %v197 = vsel %vm51, %v162, 0
    %199 = vmatprep.subr.bf16.mxu0 0
    %200 = vmatpush1.bf16.xpose.msra.mxu0 %v197
    %201 = vmatprep.subr.bf16.mxu0 0
    %202 = vmatpush1.bf16.xpose.msra.mxu0 0
    %203 = vmatprep.subr.bf16.mxu0 0
    %204 = vmatpush1.bf16.xpose.msra.mxu0 0
    %205 = vmatprep.subr.bf16.mxu0 0
    %206 = vmatpush1.bf16.xpose.msra.mxu0 0
    %207 = vmatprep.subr.bf16.mxu0 0
    %208 = vmatpush1.bf16.xpose.msra.mxu0 0
    %209 = vmatprep.subr.bf16.mxu0 0
    %210 = vmatpush1.bf16.xpose.msra.mxu0 0
    %211 = vmatprep.subr.bf16.mxu0 0
    %212 = vmatpush1.bf16.xpose.msra.mxu0 0
    %213 = vmatprep.subr.bf16.mxu0 0
    %214 = vmatpush1.bf16.xpose.msra.mxu0 0
    %215 = vmatprep.subr.bf16.mxu0 0
    %216 = vmatpush1.bf16.xpose.msra.mxu0 0
    %217 = vmatprep.subr.bf16.mxu0 0
    %218 = vmatpush1.bf16.xpose.msra.mxu0 0
    %219 = vmatprep.subr.bf16.mxu0 0
    %220 = vmatpush1.bf16.xpose.msra.mxu0 0
    %221 = vmatprep.subr.bf16.mxu0 0
    %222 = vmatpush1.bf16.xpose.msra.mxu0 0
    %223 = vmatprep.subr.bf16.mxu0 0
    %224 = vmatpush1.bf16.xpose.msra.mxu0 0
    %225 = vmatprep.subr.bf16.mxu0 0
    %226 = vmatpush1.bf16.xpose.msra.mxu0 0
    %227 = vmatprep.subr.bf16.mxu0 0
    %228 = vmatpush1.bf16.xpose.msra.mxu0 0
    %229 = vmatprep.subr.bf16.mxu0 0
    %230 = vmatpush1.bf16.xpose.msra.mxu0 0
    %231 = vmatprep.mubr.bf16.mxu0 0
    %232 = vmatmul.mubr.bf16.gmra.mrb[0].mxu0 %v188
    %v233 = vpop.f32.mrb[0].mxu0
    %v234 = vadd.f32 %v170, %v233
    %v235 = vpop.f32.mrb[0].mxu0
    %v236 = vpop.f32.mrb[0].mxu0
    %v237 = vadd.f32 %v172, %v236
    %v238 = vpop.f32.mrb[0].mxu0
    %239 = vmatprep.mubr.bf16.mxu0 0
    %240 = vmatmul.mubr.bf16.gmra.mrb[0].mxu0 %v191
    %v241 = vpop.f32.mrb[0].mxu0
    %v242 = vadd.f32 %v174, %v241
    %v243 = vpop.f32.mrb[0].mxu0
    %v244 = vpop.f32.mrb[0].mxu0
    %v245 = vadd.f32 %v176, %v244
    %v246 = vpop.f32.mrb[0].mxu0
    %247 = vmatprep.mubr.bf16.mxu0 0
    %248 = vmatmul.mubr.bf16.gmra.mrb[0].mxu0 %v194
    %v249 = vpop.f32.mrb[0].mxu0
    %v250 = vadd.f32 %v178, %v249
    %v251 = vpop.f32.mrb[0].mxu0
    %v252 = vpop.f32.mrb[0].mxu0
    %v253 = vadd.f32 %v180, %v252
    %v254 = vpop.f32.mrb[0].mxu0
    %255 = vdwg.mxu0
    %vm256 = vcmask 97280
    %v257 = vsel %vm256, %v234, -inf
    %258 = vmax.xlane.f32.xlu0 %v257
    %v259 = vpop.xlane.xlu0 %258
    %v260 = vsel %vm256, %v237, -inf
    %261 = vmax.xlane.f32.xlu0 %v260
    %v262 = vpop.xlane.xlu0 %261
    %v263 = vsel %vm256, %v242, -inf
    %264 = vmax.xlane.f32.xlu0 %v263
    %v265 = vpop.xlane.xlu0 %264
    %v266 = vsel %vm256, %v245, -inf
    %267 = vmax.xlane.f32.xlu0 %v266
    %v268 = vpop.xlane.xlu0 %267
    %v269 = vsel %vm256, %v250, -inf
    %270 = vmax.xlane.f32.xlu0 %v269
    %v271 = vpop.xlane.xlu0 %270
    %v272 = vsel %vm256, %v253, -inf
    %273 = vmax.xlane.f32.xlu0 %v272
    %v274 = vpop.xlane.xlu0 %273
    %v275 = vsub.f32 %v234, %v259
    %v276 = vsub.f32 %v237, %v262
    %v277 = vsub.f32 %v242, %v265
    %v278 = vsub.f32 %v245, %v268
    %v279 = vsub.f32 %v250, %v271
    %v280 = vsub.f32 %v253, %v274
    %v281 = vmul.f32 %v275, 1.442695
    %v282 = vpow.pop %v281
    %v283 = vmul.f32 %v276, 1.442695
    %v284 = vpow.pop %v283
    %v285 = vmul.f32 %v277, 1.442695
    %v286 = vpow.pop %v285
    %v287 = vmul.f32 %v278, 1.442695
    %v288 = vpow.pop %v287
    %v289 = vmul.f32 %v279, 1.442695
    %v290 = vpow.pop %v289
    %v291 = vmul.f32 %v280, 1.442695
    %v292 = vpow.pop %v291
    %v293 = vsel %vm256, %v282, 0.0
    %294 = vadd.xlane.f32.xlu0 %v293
    %v295 = vpop.xlane.xlu0 %294
    %v296 = vsel %vm256, %v284, 0.0
    %297 = vadd.xlane.f32.xlu0 %v296
    %v298 = vpop.xlane.xlu0 %297
    %v299 = vsel %vm256, %v286, 0.0
    %300 = vadd.xlane.f32.xlu0 %v299
    %v301 = vpop.xlane.xlu0 %300
    %v302 = vsel %vm256, %v288, 0.0
    %303 = vadd.xlane.f32.xlu0 %v302
    %v304 = vpop.xlane.xlu0 %303
    %v305 = vsel %vm256, %v290, 0.0
    %306 = vadd.xlane.f32.xlu0 %v305
    %v307 = vpop.xlane.xlu0 %306
    %v308 = vsel %vm256, %v292, 0.0
    %309 = vadd.xlane.f32.xlu0 %v308
    %v310 = vpop.xlane.xlu0 %309
    %v311 = vrcp.pop %v295
    %v312 = vmul.f32 %v282, %v311
    %v313 = vrcp.pop %v298
    %v314 = vmul.f32 %v284, %v313
    %v315 = vrcp.pop %v301
    %v316 = vmul.f32 %v286, %v315
    %v317 = vrcp.pop %v304
    %v318 = vmul.f32 %v288, %v317
    %v319 = vrcp.pop %v307
    %v320 = vmul.f32 %v290, %v319
    %v321 = vrcp.pop %v310
    %v322 = vmul.f32 %v292, %v321
    %v323 = vpack.c.bf16 %v314, %v312
    %v324 = vpack.c.bf16 %v318, %v316
    %v325 = vpack.c.bf16 %v322, %v320
    %v326 = vpack.c.bf16 %v139, %v135
    %328 = vrot.lane.b32.xlu0 %v159, 64
    %v329 = vpop.permute.xlu0 %328
    %330 = vrot.lane.b32.xlu0 %v326, 64
    %v331 = vpop.permute.xlu0 %330
    %vm332 = vcmask 523264
    %v333 = vsel %vm332, %v329, %v331
    %v335 = vsel %vm256, %v323, 0
    %v338 = vsel %vm256, %v324, 0
    %v341 = vsel %vm256, %v325, 0
    %vm343 = vcmask 1045504
    %v345 = vsel %vm343, %v333, 0
    %347 = vmatprep.subr.bf16.mxu0 0
    %348 = vmatpush1.bf16.msra.mxu0 %v345
    %349 = vmatprep.subr.bf16.mxu0 0
    %350 = vmatpush1.bf16.msra.mxu0 0
    %351 = vmatprep.subr.bf16.mxu0 0
    %352 = vmatpush1.bf16.msra.mxu0 0
    %353 = vmatprep.subr.bf16.mxu0 0
    %354 = vmatpush1.bf16.msra.mxu0 0
    %355 = vmatprep.subr.bf16.mxu0 0
    %356 = vmatpush1.bf16.msra.mxu0 0
    %357 = vmatprep.subr.bf16.mxu0 0
    %358 = vmatpush1.bf16.msra.mxu0 0
    %359 = vmatprep.subr.bf16.mxu0 0
    %360 = vmatpush1.bf16.msra.mxu0 0
    %361 = vmatprep.subr.bf16.mxu0 0
    %362 = vmatpush1.bf16.msra.mxu0 0
    %363 = vmatprep.subr.bf16.mxu0 0
    %364 = vmatpush1.bf16.msra.mxu0 0
    %365 = vmatprep.subr.bf16.mxu0 0
    %366 = vmatpush1.bf16.msra.mxu0 0
    %367 = vmatprep.subr.bf16.mxu0 0
    %368 = vmatpush1.bf16.msra.mxu0 0
    %369 = vmatprep.subr.bf16.mxu0 0
    %370 = vmatpush1.bf16.msra.mxu0 0
    %371 = vmatprep.subr.bf16.mxu0 0
    %372 = vmatpush1.bf16.msra.mxu0 0
    %373 = vmatprep.subr.bf16.mxu0 0
    %374 = vmatpush1.bf16.msra.mxu0 0
    %375 = vmatprep.subr.bf16.mxu0 0
    %376 = vmatpush1.bf16.msra.mxu0 0
    %377 = vmatprep.subr.bf16.mxu0 0
    %378 = vmatpush1.bf16.msra.mxu0 0
    %379 = vmatprep.mubr.bf16.mxu0 0
    %380 = vmatmul.mubr.bf16.gmra.mrb[0].mxu0 %v335
    %v381 = vpop.f32.mrb[0].mxu0
    %v382 = vadd.f32 0.0, %v381
    %v383 = vpop.f32.mrb[0].mxu0
    %v384 = vpop.f32.mrb[0].mxu0
    %v385 = vadd.f32 0.0, %v384
    %v386 = vpop.f32.mrb[0].mxu0
    %387 = vmatprep.mubr.bf16.mxu0 0
    %388 = vmatmul.mubr.bf16.gmra.mrb[0].mxu0 %v338
    %v389 = vpop.f32.mrb[0].mxu0
    %v390 = vadd.f32 0.0, %v389
    %v391 = vpop.f32.mrb[0].mxu0
    %v392 = vpop.f32.mrb[0].mxu0
    %v393 = vadd.f32 0.0, %v392
    %v394 = vpop.f32.mrb[0].mxu0
    %395 = vmatprep.mubr.bf16.mxu0 0
    %396 = vmatmul.mubr.bf16.gmra.mrb[0].mxu0 %v341
    %v397 = vpop.f32.mrb[0].mxu0
    %v398 = vadd.f32 0.0, %v397
    %v399 = vpop.f32.mrb[0].mxu0
    %v400 = vpop.f32.mrb[0].mxu0
    %v401 = vadd.f32 0.0, %v400
    %v402 = vpop.f32.mrb[0].mxu0
    %403 = vdwg.mxu0
    %v404 = vlaneseq
    %v405 = vshrl.u32 %v404, 7
    %v406 = vsub.s32 1, %v405
    %v407 = vrot.slane %v38, %v406
    %v408 = vadd.f32 %v407, %v382
    %v409 = vadd.f32 %v407, %v385
    %v412 = vrot.slane %v385, 4
    %v413 = vrot.slane %v390, 4
    %v414 = vsel %vm143, %v412, %v413
    %415 = vrot.lane.b32.xlu0 %v414, 96
    %v416 = vpop.permute.xlu0 %415
    %417 = vrot.lane.b32.xlu0 %v413, 96
    %v418 = vpop.permute.xlu0 %417
    %v421 = vadd.f32 %v408, %v416
    %v422 = vadd.f32 %v409, %v418
    %425 = vrot.lane.b32.xlu0 %v393, 64
    %v426 = vpop.permute.xlu0 %425
    %427 = vrot.lane.b32.xlu0 %v398, 64
    %v428 = vpop.permute.xlu0 %427
    %v431 = vadd.f32 %v421, %v426
    %v432 = vadd.f32 %v422, %v428
    %v434 = vrot.slane %v398, 4
    %v435 = vrot.slane %v401, 4
    %v436 = vsel %vm143, %v434, %v435
    %437 = vrot.lane.b32.xlu0 %v436, 32
    %v438 = vpop.permute.xlu0 %437
    %439 = vrot.lane.b32.xlu0 %v435, 32
    %v440 = vpop.permute.xlu0 %439
    %v443 = vadd.f32 %v431, %v438
    %v444 = vadd.f32 %v432, %v440
    %v445 = vadd.f32 %v64, %v443
    %v446 = vadd.f32 %v65, %v444
    %v447 = vsel %vm51, %v445, 0.0
    %448 = vadd.xlane.f32.xlu0 %v447
    %v449 = vpop.xlane.xlu0 %448
    %vm450 = vcmask 257024
    %v451 = vsel %vm450, %v446, 0.0
    %452 = vadd.xlane.f32.xlu0 %v451
    %v453 = vpop.xlane.xlu0 %452
    %v454 = vrcp.pop 32.0
    %v455 = vmul.f32 %v449, %v454
    %v456 = vmul.f32 %v453, %v454
    %v457 = vsub.f32 %v445, %v455
    %v458 = vsub.f32 %v446, %v456
    %v459 = vmul.f32 %v457, %v457
    %v460 = vmul.f32 %v458, %v458
    %v461 = vsel %vm51, %v459, 0.0
    %462 = vadd.xlane.f32.xlu0 %v461
    %v463 = vpop.xlane.xlu0 %462
    %v464 = vsel %vm450, %v460, 0.0
    %465 = vadd.xlane.f32.xlu0 %v464
    %v466 = vpop.xlane.xlu0 %465
    %v467 = vmul.f32 %v463, %v454
    %v468 = vmul.f32 %v466, %v454
    %v469 = vadd.f32 %v467, 1e-05
    %v470 = vadd.f32 %v468, 1e-05
    %v471 = vrsqrt.pop %v469
    %v472 = vrsqrt.pop %v470
    %v473 = vmul.f32 %v457, %v471
    %v474 = vmul.f32 %v458, %v472
    %v475 = vlaneseq
    %v476 = vshrl.u32 %v475, 7
    %v477 = vsub.s32 5, %v476
    %v478 = vrot.slane %v38, %v477
    %v479 = vmul.f32 %v473, %v478
    %v480 = vmul.f32 %v474, %v478
    %v481 = vlaneseq
    %v482 = vshrl.u32 %v481, 7
    %v483 = vsub.s32 6, %v482
    %v484 = vrot.slane %v38, %v483
    %v485 = vadd.f32 %v479, %v484
    %v486 = vadd.f32 %v480, %v484
    %v487 = vpack.c.bf16 %v486, %v485
    %v488 = vlaneseq
    %v489 = vshrl.u32 %v488, 7
    %v490 = vsub.s32 2, %v489
    %v491 = vrot.slane %v38, %v490
    %492 = vrot.lane.b32.xlu0 %v88, 64
    %v493 = vpop.permute.xlu0 %492
    %494 = vrot.lane.b32.xlu0 %v90, 64
    %v495 = vpop.permute.xlu0 %494
    %v499 = vsel %vm51, %v487, 0
    %501 = vmatprep.subr.bf16.mxu0 0
    %502 = vmatpush1.bf16.msra.mxu0 %v493
    %503 = vmatprep.subr.bf16.mxu0 0
    %504 = vmatpush1.bf16.msra.mxu0 %v495
    %505 = vmatprep.subr.bf16.mxu0 0
    %506 = vmatpush1.bf16.msra.mxu0 0
    %507 = vmatprep.subr.bf16.mxu0 0
    %508 = vmatpush1.bf16.msra.mxu0 0
    %509 = vmatprep.subr.bf16.mxu0 0
    %510 = vmatpush1.bf16.msra.mxu0 0
    %511 = vmatprep.subr.bf16.mxu0 0
    %512 = vmatpush1.bf16.msra.mxu0 0
    %513 = vmatprep.subr.bf16.mxu0 0
    %514 = vmatpush1.bf16.msra.mxu0 0
    %515 = vmatprep.subr.bf16.mxu0 0
    %516 = vmatpush1.bf16.msra.mxu0 0
    %517 = vmatprep.subr.bf16.mxu0 0
    %518 = vmatpush1.bf16.msra.mxu0 0
    %519 = vmatprep.subr.bf16.mxu0 0
    %520 = vmatpush1.bf16.msra.mxu0 0
    %521 = vmatprep.subr.bf16.mxu0 0
    %522 = vmatpush1.bf16.msra.mxu0 0
    %523 = vmatprep.subr.bf16.mxu0 0
    %524 = vmatpush1.bf16.msra.mxu0 0
    %525 = vmatprep.subr.bf16.mxu0 0
    %526 = vmatpush1.bf16.msra.mxu0 0
    %527 = vmatprep.subr.bf16.mxu0 0
    %528 = vmatpush1.bf16.msra.mxu0 0
    %529 = vmatprep.subr.bf16.mxu0 0
    %530 = vmatpush1.bf16.msra.mxu0 0
    %531 = vmatprep.subr.bf16.mxu0 0
    %532 = vmatpush1.bf16.msra.mxu0 0
    %533 = vmatprep.mubr.bf16.mxu0 0
    %534 = vmatmul.mubr.bf16.gmra.mrb[0].mxu0 %v499
    %v535 = vpop.f32.mrb[0].mxu0
    %v536 = vadd.f32 %v491, %v535
    %v537 = vpop.f32.mrb[0].mxu0
    %v538 = vpop.f32.mrb[0].mxu0
    %v539 = vadd.f32 %v491, %v538
    %v540 = vpop.f32.mrb[0].mxu0
    %541 = vdwg.mxu0
    %v542 = vpack.c.bf16 %v63, %v62
    %v543 = vlaneseq
    %v544 = vshrl.u32 %v543, 7
    %v545 = vsub.s32 3, %v544
    %v546 = vrot.slane %v38, %v545
    %v547 = vlaneseq
    %v548 = vshrl.u32 %v547, 7
    %v549 = vsub.s32 3, %v548
    %v550 = vrot.slane %v39, %v549
    %v555 = vunpack.c.l.b16 %v23
    %v556 = vunpack.c.l.b16 %v27
    %v557 = vunpack.c.l.b16 %v31
    %v558 = vunpack.c.l.b16 %v35
    %v559 = vpack.c.b16 %v556, %v555
    %v560 = vpack.c.b16 %v558, %v557
    %561 = vrot.lane.b32.xlu0 %v88, 32
    %v562 = vpop.permute.xlu0 %561
    %563 = vrot.lane.b32.xlu0 %v559, 32
    %v564 = vpop.permute.xlu0 %563
    %565 = vrot.lane.b32.xlu0 %v90, 32
    %v566 = vpop.permute.xlu0 %565
    %567 = vrot.lane.b32.xlu0 %v560, 32
    %v568 = vpop.permute.xlu0 %567
    %vm569 = vcmask 261120
    %v570 = vsel %vm569, %v562, %v564
    %v571 = vsel %vm569, %v566, %v568
    %v577 = vsel %vm51, %v542, 0
    %579 = vmatprep.subr.bf16.mxu0 %v564
    %580 = vmatpush1.bf16.msra.mxu0 %v570
    %581 = vmatprep.subr.bf16.mxu0 %v568
    %582 = vmatpush1.bf16.msra.mxu0 %v571
    %583 = vmatprep.subr.bf16.mxu0 0
    %584 = vmatpush1.bf16.msra.mxu0 0
    %585 = vmatprep.subr.bf16.mxu0 0
    %586 = vmatpush1.bf16.msra.mxu0 0
    %587 = vmatprep.subr.bf16.mxu0 0
    %588 = vmatpush1.bf16.msra.mxu0 0
    %589 = vmatprep.subr.bf16.mxu0 0
    %590 = vmatpush1.bf16.msra.mxu0 0
    %591 = vmatprep.subr.bf16.mxu0 0
    %592 = vmatpush1.bf16.msra.mxu0 0
    %593 = vmatprep.subr.bf16.mxu0 0
    %594 = vmatpush1.bf16.msra.mxu0 0
    %595 = vmatprep.subr.bf16.mxu0 0
    %596 = vmatpush1.bf16.msra.mxu0 0
    %597 = vmatprep.subr.bf16.mxu0 0
    %598 = vmatpush1.bf16.msra.mxu0 0
    %599 = vmatprep.subr.bf16.mxu0 0
    %600 = vmatpush1.bf16.msra.mxu0 0
    %601 = vmatprep.subr.bf16.mxu0 0
    %602 = vmatpush1.bf16.msra.mxu0 0
    %603 = vmatprep.subr.bf16.mxu0 0
    %604 = vmatpush1.bf16.msra.mxu0 0
    %605 = vmatprep.subr.bf16.mxu0 0
    %606 = vmatpush1.bf16.msra.mxu0 0
    %607 = vmatprep.subr.bf16.mxu0 0
    %608 = vmatpush1.bf16.msra.mxu0 0
    %609 = vmatprep.subr.bf16.mxu0 0
    %610 = vmatpush1.bf16.msra.mxu0 0
    %611 = vmatprep.mubr.bf16.mxu0 0
    %612 = vmatmul.mubr.bf16.gmra.mrb[0].mxu0 %v577
    %v613 = vpop.f32.mrb[0].mxu0
    %v614 = vadd.f32 %v546, %v613
    %v615 = vpop.f32.mrb[0].mxu0
    %v616 = vadd.f32 %v550, %v615
    %v617 = vpop.f32.mrb[0].mxu0
    %v618 = vadd.f32 %v546, %v617
    %v619 = vpop.f32.mrb[0].mxu0
    %v620 = vadd.f32 %v550, %v619
    %621 = vdwg.mxu0
    %v624 = vrot.slane %v536, 4
    %v625 = vrot.slane %v539, 4
    %v626 = vsel %vm143, %v624, %v625
    %v629 = vsel %vm143, %v539, %v624
    %v630 = vmul.f32 %v536, %v41
    %v631 = vmul.f32 %v629, %v42
    %v632 = vmul.f32 %v626, %v43
    %v633 = vmul.f32 %v536, %v44
    %v634 = vmul.f32 %v629, %v45
    %v635 = vmul.f32 %v626, %v46
    %v636 = vpack.c.bf16 %v631, %v630
    %v637 = vpack.c.bf16 %v633, %v632
    %v638 = vpack.c.bf16 %v635, %v634
    %v639 = vpack.c.bf16 %v618, %v614
    %640 = vrot.lane.b32.xlu0 %v41, 84
    %v641 = vpop.permute.xlu0 %640
    %642 = vrot.lane.b32.xlu0 %v42, 84
    %v643 = vpop.permute.xlu0 %642
    %644 = vrot.lane.b32.xlu0 %v43, 84
    %v645 = vpop.permute.xlu0 %644
    %646 = vrot.lane.b32.xlu0 %v44, 84
    %v647 = vpop.permute.xlu0 %646
    %648 = vrot.lane.b32.xlu0 %v45, 84
    %v649 = vpop.permute.xlu0 %648
    %650 = vrot.lane.b32.xlu0 %v46, 84
    %v651 = vpop.permute.xlu0 %650
    %v659 = vsel %vm51, %v636, 0
    %v662 = vsel %vm51, %v637, 0
    %v665 = vsel %vm51, %v638, 0
    %v668 = vsel %vm51, %v639, 0
    %670 = vmatprep.subr.bf16.mxu0 0
    %671 = vmatpush1.bf16.xpose.msra.mxu0 %v668
    %672 = vmatprep.subr.bf16.mxu0 0
    %673 = vmatpush1.bf16.xpose.msra.mxu0 0
    %674 = vmatprep.subr.bf16.mxu0 0
    %675 = vmatpush1.bf16.xpose.msra.mxu0 0
    %676 = vmatprep.subr.bf16.mxu0 0
    %677 = vmatpush1.bf16.xpose.msra.mxu0 0
    %678 = vmatprep.subr.bf16.mxu0 0
    %679 = vmatpush1.bf16.xpose.msra.mxu0 0
    %680 = vmatprep.subr.bf16.mxu0 0
    %681 = vmatpush1.bf16.xpose.msra.mxu0 0
    %682 = vmatprep.subr.bf16.mxu0 0
    %683 = vmatpush1.bf16.xpose.msra.mxu0 0
    %684 = vmatprep.subr.bf16.mxu0 0
    %685 = vmatpush1.bf16.xpose.msra.mxu0 0
    %686 = vmatprep.subr.bf16.mxu0 0
    %687 = vmatpush1.bf16.xpose.msra.mxu0 0
    %688 = vmatprep.subr.bf16.mxu0 0
    %689 = vmatpush1.bf16.xpose.msra.mxu0 0
    %690 = vmatprep.subr.bf16.mxu0 0
    %691 = vmatpush1.bf16.xpose.msra.mxu0 0
    %692 = vmatprep.subr.bf16.mxu0 0
    %693 = vmatpush1.bf16.xpose.msra.mxu0 0
    %694 = vmatprep.subr.bf16.mxu0 0
    %695 = vmatpush1.bf16.xpose.msra.mxu0 0
    %696 = vmatprep.subr.bf16.mxu0 0
    %697 = vmatpush1.bf16.xpose.msra.mxu0 0
    %698 = vmatprep.subr.bf16.mxu0 0
    %699 = vmatpush1.bf16.xpose.msra.mxu0 0
    %700 = vmatprep.subr.bf16.mxu0 0
    %701 = vmatpush1.bf16.xpose.msra.mxu0 0
    %702 = vmatprep.mubr.bf16.mxu0 0
    %703 = vmatmul.mubr.bf16.gmra.mrb[0].mxu0 %v659
    %v704 = vpop.f32.mrb[0].mxu0
    %v705 = vadd.f32 %v641, %v704
    %v706 = vpop.f32.mrb[0].mxu0
    %v707 = vpop.f32.mrb[0].mxu0
    %v708 = vadd.f32 %v643, %v707
    %v709 = vpop.f32.mrb[0].mxu0
    %710 = vmatprep.mubr.bf16.mxu0 0
    %711 = vmatmul.mubr.bf16.gmra.mrb[0].mxu0 %v662
    %v712 = vpop.f32.mrb[0].mxu0
    %v713 = vadd.f32 %v645, %v712
    %v714 = vpop.f32.mrb[0].mxu0
    %v715 = vpop.f32.mrb[0].mxu0
    %v716 = vadd.f32 %v647, %v715
    %v717 = vpop.f32.mrb[0].mxu0
    %718 = vmatprep.mubr.bf16.mxu0 0
    %719 = vmatmul.mubr.bf16.gmra.mrb[0].mxu0 %v665
    %v720 = vpop.f32.mrb[0].mxu0
    %v721 = vadd.f32 %v649, %v720
    %v722 = vpop.f32.mrb[0].mxu0
    %v723 = vpop.f32.mrb[0].mxu0
    %v724 = vadd.f32 %v651, %v723
    %v725 = vpop.f32.mrb[0].mxu0
    %726 = vdwg.mxu0
    %vm727 = vcmask 130048
    %v728 = vsel %vm727, %v705, -inf
    %729 = vmax.xlane.f32.xlu0 %v728
    %v730 = vpop.xlane.xlu0 %729
    %v731 = vsel %vm727, %v708, -inf
    %732 = vmax.xlane.f32.xlu0 %v731
    %v733 = vpop.xlane.xlu0 %732
    %v734 = vsel %vm727, %v713, -inf
    %735 = vmax.xlane.f32.xlu0 %v734
    %v736 = vpop.xlane.xlu0 %735
    %v737 = vsel %vm727, %v716, -inf
    %738 = vmax.xlane.f32.xlu0 %v737
    %v739 = vpop.xlane.xlu0 %738
    %v740 = vsel %vm727, %v721, -inf
    %741 = vmax.xlane.f32.xlu0 %v740
    %v742 = vpop.xlane.xlu0 %741
    %v743 = vsel %vm727, %v724, -inf
    %744 = vmax.xlane.f32.xlu0 %v743
    %v745 = vpop.xlane.xlu0 %744
    %v746 = vsub.f32 %v705, %v730
    %v747 = vsub.f32 %v708, %v733
    %v748 = vsub.f32 %v713, %v736
    %v749 = vsub.f32 %v716, %v739
    %v750 = vsub.f32 %v721, %v742
    %v751 = vsub.f32 %v724, %v745
    %v752 = vmul.f32 %v746, 1.442695
    %v753 = vpow.pop %v752
    %v754 = vmul.f32 %v747, 1.442695
    %v755 = vpow.pop %v754
    %v756 = vmul.f32 %v748, 1.442695
    %v757 = vpow.pop %v756
    %v758 = vmul.f32 %v749, 1.442695
    %v759 = vpow.pop %v758
    %v760 = vmul.f32 %v750, 1.442695
    %v761 = vpow.pop %v760
    %v762 = vmul.f32 %v751, 1.442695
    %v763 = vpow.pop %v762
    %v764 = vsel %vm727, %v753, 0.0
    %765 = vadd.xlane.f32.xlu0 %v764
    %v766 = vpop.xlane.xlu0 %765
    %v767 = vsel %vm727, %v755, 0.0
    %768 = vadd.xlane.f32.xlu0 %v767
    %v769 = vpop.xlane.xlu0 %768
    %v770 = vsel %vm727, %v757, 0.0
    %771 = vadd.xlane.f32.xlu0 %v770
    %v772 = vpop.xlane.xlu0 %771
    %v773 = vsel %vm727, %v759, 0.0
    %774 = vadd.xlane.f32.xlu0 %v773
    %v775 = vpop.xlane.xlu0 %774
    %v776 = vsel %vm727, %v761, 0.0
    %777 = vadd.xlane.f32.xlu0 %v776
    %v778 = vpop.xlane.xlu0 %777
    %v779 = vsel %vm727, %v763, 0.0
    %780 = vadd.xlane.f32.xlu0 %v779
    %v781 = vpop.xlane.xlu0 %780
    %v782 = vrcp.pop %v766
    %v783 = vmul.f32 %v753, %v782
    %v784 = vrcp.pop %v769
    %v785 = vmul.f32 %v755, %v784
    %v786 = vrcp.pop %v772
    %v787 = vmul.f32 %v757, %v786
    %v788 = vrcp.pop %v775
    %v789 = vmul.f32 %v759, %v788
    %v790 = vrcp.pop %v778
    %v791 = vmul.f32 %v761, %v790
    %v792 = vrcp.pop %v781
    %v793 = vmul.f32 %v763, %v792
    %v794 = vpack.c.bf16 %v785, %v783
    %v795 = vpack.c.bf16 %v789, %v787
    %v796 = vpack.c.bf16 %v793, %v791
    %v797 = vpack.c.bf16 %v620, %v616
    %800 = vrot.lane.b32.xlu0 %v639, 96
    %v801 = vpop.permute.xlu0 %800
    %802 = vrot.lane.b32.xlu0 %v797, 96
    %v803 = vpop.permute.xlu0 %802
    %vm804 = vcmask 785408
    %v805 = vsel %vm804, %v801, %v803
    %v808 = vsel %vm727, %v794, 0
    %v811 = vsel %vm727, %v795, 0
    %v814 = vsel %vm727, %v796, 0
    %816 = vmatprep.subr.bf16.mxu0 0
    %817 = vmatpush1.bf16.msra.mxu0 %v805
    %818 = vmatprep.subr.bf16.mxu0 0
    %819 = vmatpush1.bf16.msra.mxu0 0
    %820 = vmatprep.subr.bf16.mxu0 0
    %821 = vmatpush1.bf16.msra.mxu0 0
    %822 = vmatprep.subr.bf16.mxu0 0
    %823 = vmatpush1.bf16.msra.mxu0 0
    %824 = vmatprep.subr.bf16.mxu0 0
    %825 = vmatpush1.bf16.msra.mxu0 0
    %826 = vmatprep.subr.bf16.mxu0 0
    %827 = vmatpush1.bf16.msra.mxu0 0
    %828 = vmatprep.subr.bf16.mxu0 0
    %829 = vmatpush1.bf16.msra.mxu0 0
    %830 = vmatprep.subr.bf16.mxu0 0
    %831 = vmatpush1.bf16.msra.mxu0 0
    %832 = vmatprep.subr.bf16.mxu0 0
    %833 = vmatpush1.bf16.msra.mxu0 0
    %834 = vmatprep.subr.bf16.mxu0 0
    %835 = vmatpush1.bf16.msra.mxu0 0
    %836 = vmatprep.subr.bf16.mxu0 0
    %837 = vmatpush1.bf16.msra.mxu0 0
    %838 = vmatprep.subr.bf16.mxu0 0
    %839 = vmatpush1.bf16.msra.mxu0 0
    %840 = vmatprep.subr.bf16.mxu0 0
    %841 = vmatpush1.bf16.msra.mxu0 0
    %842 = vmatprep.subr.bf16.mxu0 0
    %843 = vmatpush1.bf16.msra.mxu0 0
    %844 = vmatprep.subr.bf16.mxu0 0
    %845 = vmatpush1.bf16.msra.mxu0 0
    %846 = vmatprep.subr.bf16.mxu0 0
    %847 = vmatpush1.bf16.msra.mxu0 0
    %848 = vmatprep.mubr.bf16.mxu0 0
    %849 = vmatmul.mubr.bf16.gmra.mrb[0].mxu0 %v808
    %v850 = vpop.f32.mrb[0].mxu0
    %v851 = vadd.f32 0.0, %v850
    %v852 = vpop.f32.mrb[0].mxu0
    %v853 = vpop.f32.mrb[0].mxu0
    %v854 = vadd.f32 0.0, %v853
    %v855 = vpop.f32.mrb[0].mxu0
    %856 = vmatprep.mubr.bf16.mxu0 0
    %857 = vmatmul.mubr.bf16.gmra.mrb[0].mxu0 %v811
    %v858 = vpop.f32.mrb[0].mxu0
    %v859 = vadd.f32 0.0, %v858
    %v860 = vpop.f32.mrb[0].mxu0
    %v861 = vpop.f32.mrb[0].mxu0
    %v862 = vadd.f32 0.0, %v861
    %v863 = vpop.f32.mrb[0].mxu0
    %864 = vmatprep.mubr.bf16.mxu0 0
    %865 = vmatmul.mubr.bf16.gmra.mrb[0].mxu0 %v814
    %v866 = vpop.f32.mrb[0].mxu0
    %v867 = vadd.f32 0.0, %v866
    %v868 = vpop.f32.mrb[0].mxu0
    %v869 = vpop.f32.mrb[0].mxu0
    %v870 = vadd.f32 0.0, %v869
    %v871 = vpop.f32.mrb[0].mxu0
    %872 = vdwg.mxu0
    %v873 = vlaneseq
    %v874 = vshrl.u32 %v873, 7
    %v875 = vsub.s32 4, %v874
    %v876 = vrot.slane %v38, %v875
    %v877 = vadd.f32 %v876, %v851
    %v878 = vadd.f32 %v876, %v854
    %v881 = vrot.slane %v854, 4
    %v882 = vrot.slane %v859, 4
    %v883 = vsel %vm143, %v881, %v882
    %884 = vrot.lane.b32.xlu0 %v883, 96
    %v885 = vpop.permute.xlu0 %884
    %886 = vrot.lane.b32.xlu0 %v882, 96
    %v887 = vpop.permute.xlu0 %886
    %v890 = vadd.f32 %v877, %v885
    %v891 = vadd.f32 %v878, %v887
    %894 = vrot.lane.b32.xlu0 %v862, 64
    %v895 = vpop.permute.xlu0 %894
    %896 = vrot.lane.b32.xlu0 %v867, 64
    %v897 = vpop.permute.xlu0 %896
    %v900 = vadd.f32 %v890, %v895
    %v901 = vadd.f32 %v891, %v897
    %v903 = vrot.slane %v867, 4
    %v904 = vrot.slane %v870, 4
    %v905 = vsel %vm143, %v903, %v904
    %906 = vrot.lane.b32.xlu0 %v905, 32
    %v907 = vpop.permute.xlu0 %906
    %908 = vrot.lane.b32.xlu0 %v904, 32
    %v909 = vpop.permute.xlu0 %908
    %v912 = vadd.f32 %v900, %v907
    %v913 = vadd.f32 %v901, %v909
    %v914 = vadd.f32 %v485, %v912
    %v915 = vadd.f32 %v486, %v913
    %v916 = vsel %vm51, %v914, 0.0
    %917 = vadd.xlane.f32.xlu0 %v916
    %v918 = vpop.xlane.xlu0 %917
    %v919 = vsel %vm450, %v915, 0.0
    %920 = vadd.xlane.f32.xlu0 %v919
    %v921 = vpop.xlane.xlu0 %920
    %v922 = vmul.f32 %v918, %v454
    %v923 = vmul.f32 %v921, %v454
    %v924 = vsub.f32 %v914, %v922
    %v925 = vsub.f32 %v915, %v923
    %v926 = vmul.f32 %v924, %v924
    %v927 = vmul.f32 %v925, %v925
    %v928 = vsel %vm51, %v926, 0.0
    %929 = vadd.xlane.f32.xlu0 %v928
    %v930 = vpop.xlane.xlu0 %929
    %v931 = vsel %vm450, %v927, 0.0
    %932 = vadd.xlane.f32.xlu0 %v931
    %v933 = vpop.xlane.xlu0 %932
    %v934 = vmul.f32 %v930, %v454
    %v935 = vmul.f32 %v933, %v454
    %v936 = vadd.f32 %v934, 1e-05
    %v937 = vadd.f32 %v935, 1e-05
    %v938 = vrsqrt.pop %v936
    %v939 = vrsqrt.pop %v937
    %v940 = vmul.f32 %v924, %v938
    %v941 = vmul.f32 %v925, %v939
    %v942 = vlaneseq
    %v943 = vshrl.u32 %v942, 7
    %v944 = vsub.s32 7, %v943
    %v945 = vrot.slane %v38, %v944
    %v946 = vmul.f32 %v940, %v945
    %v947 = vmul.f32 %v941, %v945
    %v948 = vlaneseq
    %v949 = vshrl.u32 %v948, 7
    %v950 = vsub.s32 0, %v949
    %v951 = vrot.slane %v40, %v950
    %v952 = vadd.f32 %v946, %v951
    %v953 = vadd.f32 %v947, %v951
    %v954 = vpack.c.bf16 %v953, %v952
    %v955 = vlaneseq
    %v956 = vshrl.u32 %v955, 7
    %v957 = vsub.s32 3, %v956
    %v958 = vrot.slane %v40, %v957
    %v959 = vunpack.c.h.b16 %v23
    %v960 = vunpack.c.h.b16 %v27
    %v961 = vunpack.c.h.b16 %v31
    %v962 = vunpack.c.h.b16 %v35
    %v963 = vpack.c.b16 %v960, %v959
    %v964 = vpack.c.b16 %v962, %v961
    %v968 = vsel %vm51, %v954, 0
    %970 = vmatprep.subr.bf16.mxu0 0
    %971 = vmatpush1.bf16.msra.mxu0 %v963
    %972 = vmatprep.subr.bf16.mxu0 0
    %973 = vmatpush1.bf16.msra.mxu0 %v964
    %974 = vmatprep.subr.bf16.mxu0 0
    %975 = vmatpush1.bf16.msra.mxu0 0
    %976 = vmatprep.subr.bf16.mxu0 0
    %977 = vmatpush1.bf16.msra.mxu0 0
    %978 = vmatprep.subr.bf16.mxu0 0
    %979 = vmatpush1.bf16.msra.mxu0 0
    %980 = vmatprep.subr.bf16.mxu0 0
    %981 = vmatpush1.bf16.msra.mxu0 0
    %982 = vmatprep.subr.bf16.mxu0 0
    %983 = vmatpush1.bf16.msra.mxu0 0
    %984 = vmatprep.subr.bf16.mxu0 0
    %985 = vmatpush1.bf16.msra.mxu0 0
    %986 = vmatprep.subr.bf16.mxu0 0
    %987 = vmatpush1.bf16.msra.mxu0 0
    %988 = vmatprep.subr.bf16.mxu0 0
    %989 = vmatpush1.bf16.msra.mxu0 0
    %990 = vmatprep.subr.bf16.mxu0 0
    %991 = vmatpush1.bf16.msra.mxu0 0
    %992 = vmatprep.subr.bf16.mxu0 0
    %993 = vmatpush1.bf16.msra.mxu0 0
    %994 = vmatprep.subr.bf16.mxu0 0
    %995 = vmatpush1.bf16.msra.mxu0 0
    %996 = vmatprep.subr.bf16.mxu0 0
    %997 = vmatpush1.bf16.msra.mxu0 0
    %998 = vmatprep.subr.bf16.mxu0 0
    %999 = vmatpush1.bf16.msra.mxu0 0
    %1000 = vmatprep.subr.bf16.mxu0 0
    %1001 = vmatpush1.bf16.msra.mxu0 0
    %1002 = vmatprep.mubr.bf16.mxu0 0
    %1003 = vmatmul.mubr.bf16.gmra.mrb[0].mxu0 %v968
    %v1004 = vpop.f32.mrb[0].mxu0
    %v1005 = vadd.f32 %v958, %v1004
    %v1006 = vpop.f32.mrb[0].mxu0
    %v1007 = vpop.f32.mrb[0].mxu0
    %v1008 = vadd.f32 %v958, %v1007
    %v1009 = vpop.f32.mrb[0].mxu0
    %1010 = vdwg.mxu0
    %v1011 = vmax.f32 %v1005, 0.0
    %v1012 = vmax.f32 %v1008, 0.0
    %v1013 = vpack.c.bf16 %v1012, %v1011
    %v1014 = vlaneseq
    %v1015 = vshrl.u32 %v1014, 7
    %v1016 = vsub.s32 4, %v1015
    %v1017 = vrot.slane %v40, %v1016
    %v1022 = vunpack.c.l.b16 %v24
    %v1023 = vunpack.c.l.b16 %v28
    %v1024 = vunpack.c.l.b16 %v32
    %v1025 = vunpack.c.l.b16 %v36
    %v1026 = vpack.c.b16 %v1023, %v1022
    %v1027 = vpack.c.b16 %v1025, %v1024
    %1030 = vmatprep.subr.bf16.mxu0 0
    %1031 = vmatpush1.bf16.xpose.msra.mxu0 %v1026
    %1032 = vmatprep.subr.bf16.mxu0 0
    %1033 = vmatpush1.bf16.xpose.msra.mxu0 %v1027
    %1034 = vmatprep.subr.bf16.mxu0 0
    %1035 = vmatpush1.bf16.xpose.msra.mxu0 0
    %1036 = vmatprep.subr.bf16.mxu0 0
    %1037 = vmatpush1.bf16.xpose.msra.mxu0 0
    %1038 = vmatprep.subr.bf16.mxu0 0
    %1039 = vmatpush1.bf16.xpose.msra.mxu0 0
    %1040 = vmatprep.subr.bf16.mxu0 0
    %1041 = vmatpush1.bf16.xpose.msra.mxu0 0
    %1042 = vmatprep.subr.bf16.mxu0 0
    %1043 = vmatpush1.bf16.xpose.msra.mxu0 0
    %1044 = vmatprep.subr.bf16.mxu0 0
    %1045 = vmatpush1.bf16.xpose.msra.mxu0 0
    %1046 = vmatprep.subr.bf16.mxu0 0
    %1047 = vmatpush1.bf16.xpose.msra.mxu0 0
    %1048 = vmatprep.subr.bf16.mxu0 0
    %1049 = vmatpush1.bf16.xpose.msra.mxu0 0
    %1050 = vmatprep.subr.bf16.mxu0 0
    %1051 = vmatpush1.bf16.xpose.msra.mxu0 0
    %1052 = vmatprep.subr.bf16.mxu0 0
    %1053 = vmatpush1.bf16.xpose.msra.mxu0 0
    %1054 = vmatprep.subr.bf16.mxu0 0
    %1055 = vmatpush1.bf16.xpose.msra.mxu0 0
    %1056 = vmatprep.subr.bf16.mxu0 0
    %1057 = vmatpush1.bf16.xpose.msra.mxu0 0
    %1058 = vmatprep.subr.bf16.mxu0 0
    %1059 = vmatpush1.bf16.xpose.msra.mxu0 0
    %1060 = vmatprep.subr.bf16.mxu0 0
    %1061 = vmatpush1.bf16.xpose.msra.mxu0 0
    %1062 = vmatprep.mubr.bf16.mxu0 0
    %1063 = vmatmul.mubr.bf16.gmra.mrb[0].mxu0 %v1013
    %v1064 = vpop.f32.mrb[0].mxu0
    %v1065 = vadd.f32 %v1017, %v1064
    %v1066 = vpop.f32.mrb[0].mxu0
    %v1067 = vpop.f32.mrb[0].mxu0
    %v1068 = vadd.f32 %v1017, %v1067
    %v1069 = vpop.f32.mrb[0].mxu0
    %1070 = vdwg.mxu0
    %v1071 = vadd.f32 %v952, %v1065
    %v1072 = vadd.f32 %v953, %v1068
    %v1073 = vsel %vm51, %v1071, 0.0
    %1074 = vadd.xlane.f32.xlu0 %v1073
    %v1075 = vpop.xlane.xlu0 %1074
    %v1076 = vsel %vm450, %v1072, 0.0
    %1077 = vadd.xlane.f32.xlu0 %v1076
    %v1078 = vpop.xlane.xlu0 %1077
    %v1079 = vmul.f32 %v1075, %v454
    %v1080 = vmul.f32 %v1078, %v454
    %v1081 = vsub.f32 %v1071, %v1079
    %v1082 = vsub.f32 %v1072, %v1080
    %v1083 = vmul.f32 %v1081, %v1081
    %v1084 = vmul.f32 %v1082, %v1082
    %v1085 = vsel %vm51, %v1083, 0.0
    %1086 = vadd.xlane.f32.xlu0 %v1085
    %v1087 = vpop.xlane.xlu0 %1086
    %v1088 = vsel %vm450, %v1084, 0.0
    %1089 = vadd.xlane.f32.xlu0 %v1088
    %v1090 = vpop.xlane.xlu0 %1089
    %v1091 = vmul.f32 %v1087, %v454
    %v1092 = vmul.f32 %v1090, %v454
    %v1093 = vadd.f32 %v1091, 1e-05
    %v1094 = vadd.f32 %v1092, 1e-05
    %v1095 = vrsqrt.pop %v1093
    %v1096 = vrsqrt.pop %v1094
    %v1097 = vmul.f32 %v1081, %v1095
    %v1098 = vmul.f32 %v1082, %v1096
    %v1099 = vlaneseq
    %v1100 = vshrl.u32 %v1099, 7
    %v1101 = vsub.s32 1, %v1100
    %v1102 = vrot.slane %v40, %v1101
    %v1103 = vmul.f32 %v1097, %v1102
    %v1104 = vmul.f32 %v1098, %v1102
    %v1105 = vlaneseq
    %v1106 = vshrl.u32 %v1105, 7
    %v1107 = vsub.s32 2, %v1106
    %v1108 = vrot.slane %v40, %v1107
    %v1109 = vadd.f32 %v1103, %v1108
    %v1110 = vadd.f32 %v1104, %v1108
    %vm1111 = vcmask 259072
    %v1112 = vsel %vm1111, %v1109, -inf
    %v1113 = vrot.slane %v1112, 4
    %v1114 = vmax.f32 %v1112, %v1113
    %v1115 = vrot.slane %v1114, 2
    %v1116 = vmax.f32 %v1114, %v1115
    %v1117 = vrot.slane %v1116, 1
    %v1118 = vmax.f32 %v1116, %v1117
    %vm1119 = vcmask 261126
    %v1120 = vsel %vm1119, %v1109, -inf
    %v1121 = vsel %vm450, %v1110, -inf
    %v1122 = vmax.f32 %v1120, %v1121
    %v1123 = vrot.slane %v1122, 4
    %v1124 = vmax.f32 %v1122, %v1123
    %v1125 = vrot.slane %v1124, 2
    %v1126 = vmax.f32 %v1124, %v1125
    %v1127 = vrot.slane %v1126, 1
    %v1128 = vmax.f32 %v1126, %v1127
    %vm1129 = vcmask 1040384
    %v1130 = vsel %vm1129, %v1118, %v1128
    %v1131 = vpack.c.bf16 %v1130, %v1130
    %v1132 = vlaneseq
    %v1133 = vshrl.u32 %v1132, 7
    %v1134 = vsub.s32 5, %v1133
    %v1135 = vrot.slane %v40, %v1134
    %v1136 = vunpack.c.h.b16 %v24
    %v1137 = vunpack.c.h.b16 %v28
    %v1138 = vunpack.c.h.b16 %v32
    %v1139 = vunpack.c.h.b16 %v36
    %v1140 = vpack.c.b16 %v1137, %v1136
    %v1141 = vpack.c.b16 %v1139, %v1138
    %v1145 = vsel %vm51, %v1131, 0
    %1147 = vmatprep.subr.bf16.mxu0 0
    %1148 = vmatpush1.bf16.msra.mxu0 %v1140
    %1149 = vmatprep.subr.bf16.mxu0 0
    %1150 = vmatpush1.bf16.msra.mxu0 %v1141
    %1151 = vmatprep.subr.bf16.mxu0 0
    %1152 = vmatpush1.bf16.msra.mxu0 0
    %1153 = vmatprep.subr.bf16.mxu0 0
    %1154 = vmatpush1.bf16.msra.mxu0 0
    %1155 = vmatprep.subr.bf16.mxu0 0
    %1156 = vmatpush1.bf16.msra.mxu0 0
    %1157 = vmatprep.subr.bf16.mxu0 0
    %1158 = vmatpush1.bf16.msra.mxu0 0
    %1159 = vmatprep.subr.bf16.mxu0 0
    %1160 = vmatpush1.bf16.msra.mxu0 0
    %1161 = vmatprep.subr.bf16.mxu0 0
    %1162 = vmatpush1.bf16.msra.mxu0 0
    %1163 = vmatprep.subr.bf16.mxu0 0
    %1164 = vmatpush1.bf16.msra.mxu0 0
    %1165 = vmatprep.subr.bf16.mxu0 0
    %1166 = vmatpush1.bf16.msra.mxu0 0
    %1167 = vmatprep.subr.bf16.mxu0 0
    %1168 = vmatpush1.bf16.msra.mxu0 0
    %1169 = vmatprep.subr.bf16.mxu0 0
    %1170 = vmatpush1.bf16.msra.mxu0 0
    %1171 = vmatprep.subr.bf16.mxu0 0
    %1172 = vmatpush1.bf16.msra.mxu0 0
    %1173 = vmatprep.subr.bf16.mxu0 0
    %1174 = vmatpush1.bf16.msra.mxu0 0
    %1175 = vmatprep.subr.bf16.mxu0 0
    %1176 = vmatpush1.bf16.msra.mxu0 0
    %1177 = vmatprep.subr.bf16.mxu0 0
    %1178 = vmatpush1.bf16.msra.mxu0 0
    %1179 = vmatprep.mubr.bf16.mxu0 0
    %1180 = vmatmul.mubr.bf16.gmra.mrb[0].mxu0 %v1145
    %v1181 = vpop.f32.mrb[0].mxu0
    %v1182 = vadd.f32 %v1135, %v1181
    %v1183 = vpop.f32.mrb[0].mxu0
    %v1184 = vpop.f32.mrb[0].mxu0
    %v1185 = vpop.f32.mrb[0].mxu0
    %1186 = vdwg.mxu0
    %v1187 = vmax.f32 %v1182, 0.0
    %v1188 = vpack.c.bf16 %v1187, %v1187
    %v1189 = vlaneseq
    %v1190 = vshrl.u32 %v1189, 7
    %v1191 = vsub.s32 6, %v1190
    %v1192 = vrot.slane %v40, %v1191
    %v1197 = vunpack.c.l.b16 %v25
    %v1198 = vunpack.c.l.b16 %v29
    %v1199 = vunpack.c.l.b16 %v33
    %v1200 = vunpack.c.l.b16 %v37
    %v1201 = vpack.c.b16 %v1198, %v1197
    %v1202 = vpack.c.b16 %v1200, %v1199
    %1203 = vrot.lane.b32.xlu0 %v1140, 96
    %v1204 = vpop.permute.xlu0 %1203
    %1205 = vrot.lane.b32.xlu0 %v1201, 96
    %v1206 = vpop.permute.xlu0 %1205
    %1207 = vrot.lane.b32.xlu0 %v1141, 96
    %v1208 = vpop.permute.xlu0 %1207
    %1209 = vrot.lane.b32.xlu0 %v1202, 96
    %v1210 = vpop.permute.xlu0 %1209
    %v1211 = vsel %vm804, %v1204, %v1206
    %v1212 = vsel %vm804, %v1208, %v1210
    %v1216 = vsel %vm51, %v1188, 0
    %1218 = vmatprep.subr.bf16.mxu0 0
    %1219 = vmatpush1.bf16.msra.mxu0 %v1211
    %1220 = vmatprep.subr.bf16.mxu0 0
    %1221 = vmatpush1.bf16.msra.mxu0 %v1212
    %1222 = vmatprep.subr.bf16.mxu0 0
    %1223 = vmatpush1.bf16.msra.mxu0 0
    %1224 = vmatprep.subr.bf16.mxu0 0
    %1225 = vmatpush1.bf16.msra.mxu0 0
    %1226 = vmatprep.subr.bf16.mxu0 0
    %1227 = vmatpush1.bf16.msra.mxu0 0
    %1228 = vmatprep.subr.bf16.mxu0 0
    %1229 = vmatpush1.bf16.msra.mxu0 0
    %1230 = vmatprep.subr.bf16.mxu0 0
    %1231 = vmatpush1.bf16.msra.mxu0 0
    %1232 = vmatprep.subr.bf16.mxu0 0
    %1233 = vmatpush1.bf16.msra.mxu0 0
    %1234 = vmatprep.subr.bf16.mxu0 0
    %1235 = vmatpush1.bf16.msra.mxu0 0
    %1236 = vmatprep.subr.bf16.mxu0 0
    %1237 = vmatpush1.bf16.msra.mxu0 0
    %1238 = vmatprep.subr.bf16.mxu0 0
    %1239 = vmatpush1.bf16.msra.mxu0 0
    %1240 = vmatprep.subr.bf16.mxu0 0
    %1241 = vmatpush1.bf16.msra.mxu0 0
    %1242 = vmatprep.subr.bf16.mxu0 0
    %1243 = vmatpush1.bf16.msra.mxu0 0
    %1244 = vmatprep.subr.bf16.mxu0 0
    %1245 = vmatpush1.bf16.msra.mxu0 0
    %1246 = vmatprep.subr.bf16.mxu0 0
    %1247 = vmatpush1.bf16.msra.mxu0 0
    %1248 = vmatprep.subr.bf16.mxu0 0
    %1249 = vmatpush1.bf16.msra.mxu0 0
    %1250 = vmatprep.mubr.bf16.mxu0 0
    %1251 = vmatmul.mubr.bf16.gmra.mrb[0].mxu0 %v1216
    %v1252 = vpop.f32.mrb[0].mxu0
    %v1253 = vadd.f32 %v1192, %v1252
    %v1254 = vpop.f32.mrb[0].mxu0
    %v1255 = vpop.f32.mrb[0].mxu0
    %v1256 = vpop.f32.mrb[0].mxu0
    %1257 = vdwg.mxu0
    %1258 = vst [vmem:[#allocation2] sm:$0x3] %v1253
    // Predicated region
    $region22: #{forward.1} parent=1 // pred_check
      _
    $region23: #{forward.1} parent=1 // pred_check_branch
      %1260 = sbr.rel (0) target = $region25
    $region24: #{forward.1} parent=1 // pred_region
      %s1262 = ssub.s32 32, 32
      %1263 = vsyncadd [#allocation3], %s1262
      %s1265 = sshll.u32 [#allocation2], 4
      %s1266 = int_to_ptr.vmem [resolvable:$true] %s1265
      %1268 = dma.vmem_to_hbm [thread:$0]  %s1266, 32, %s5, [#allocation3]
    $region25: #{forward.1} parent=1 // pred_fallthru
      _
    // Predicated region
    $region26: #{forward.1} parent=1 // pred_check
      _
    $region27: #{forward.1} parent=1 // pred_check_branch
      %1270 = sbr.rel (0) target = $region29
    $region28: #{forward.1} parent=1 // pred_region
      %1271 = dma.done [#allocation3], 32
    $region29: #{forward.1} parent=1 // pred_fallthru
      _
    %1272 = vsyncpa [#allocation3], 1

</llo_original>
